<compile_context>
chip_gen: v7x
topology: tpu7x:2x2x1
jax: 0.10.0
libtpu: 0.0.40
codegen_flags: <defaults>
</compile_context>

<pallas_src>
import math

import jax
import jax.numpy as jnp
from jax.experimental import pallas as pl
from jax.experimental.pallas import tpu as pltpu  # noqa: F401  (TPU backend)

# ----------------------------- config (small) --------------------------------
B = 2                  # batch
IMG = 16               # input image spatial size (H = W = 16)
IN_CH = 3              # image channels
PATCH = 4              # patch-embed stride
GRID = IMG // PATCH    # 4x4 embedding grid
HW = GRID * GRID       # 16 image tokens
C = 32                 # embedding dim
MLP_HID = 64
NUM_POS_FEATS = C // 2
NUM_MASK_TOKENS = 4
NUM_OUT_TOKENS = 1 + NUM_MASK_TOKENS   # iou token + mask tokens
T_TOK = NUM_OUT_TOKENS + 2             # + 2 box-corner prompt tokens = 7
UP_C1 = 16             # channels after first transposed conv
UP_C2 = 8              # channels after second transposed conv (mask channels)
OUT_W = 16 * UP_C2     # 128: lane-dense kernel output width

# --------------------- parameter slab layouts (static) ------------------------
# Weight slab (bf16): every sub-matrix padded to 128 lanes and a 16-row multiple
# so each one starts on a (16,128) bf16 tile boundary; static slices are free.
_W_ITEMS = (
    ("patch_w",    IN_CH * PATCH * PATCH, C),
    ("enc_mlp_w1", C, MLP_HID),
    ("enc_mlp_w2", MLP_HID, C),
    ("sa_wqkv",    C, 3 * C),
    ("sa_wo",      C, C),
    ("ca_wq",      C, C),
    ("w_src",      C, 128),          # fused [ca_wk | ca_wv | up1_w]
    ("ca_wo",      C, C),
    ("dec_mlp_w1", C, MLP_HID),
    ("dec_mlp_w2", MLP_HID, C),
    ("hyp_w1",     C, C),
    ("hyp_w2",     C, C),
    ("hyp_w3_t",   C, OUT_W),        # hyp_w3 tiled over the 16 sub-pixel groups
    ("up2_wb",     4 * UP_C1, OUT_W),
)
# Constant slab (f32): biases, LN params, PE-key constant, attention masks.
_C_ITEMS = (
    ("patch_b", 1, C), ("enc_ln1", 2, C),
    ("enc_mlp_b1", 1, MLP_HID), ("enc_mlp_b2", 1, C), ("enc_ln2", 2, C),
    ("no_mask", 1, C),
    ("sa_bqkv", 1, 3 * C), ("sa_bo", 1, C), ("dec_ln1", 2, C),
    ("ca_bq", 1, C), ("b_src", 1, 128), ("ca_bo", 1, C), ("dec_ln2", 2, C),
    ("dec_mlp_b1", 1, MLP_HID), ("dec_mlp_b2", 1, C), ("dec_ln3", 2, C),
    ("hyp_b1", 1, C), ("hyp_b2", 1, C), ("hyp_b3_t", 1, OUT_W),
    ("up2_bb", 1, OUT_W),
    ("pos_k", B * HW, C),                 # precomputed dense_pe @ ca_wk
    ("mask_self", B * T_TOK, B * T_TOK),  # 0 / -1e30 block-diag batch mask
    ("mask_cross", B * T_TOK, B * HW),
)


def _make_layout(items, align):
    off, cur = {}, 0
    for name, r, cols in items:
        off[name] = (cur, r, cols)
        cur += r + (-r % align)
    return off, cur


_W_OFF, _W_ROWS = _make_layout(_W_ITEMS, 16)
_C_OFF, _C_ROWS = _make_layout(_C_ITEMS, 8)


def _pack(raw, items, align, dtype):
    parts = []
    for name, r, cols in items:
        a = jnp.asarray(raw[name], jnp.float32)
        assert a.shape == (r, cols), (name, a.shape, (r, cols))
        parts.append(jnp.pad(a, ((0, -r % align), (0, 128 - cols))))
    return jnp.concatenate(parts, axis=0).astype(dtype)


# ----------------------------- the fused kernel --------------------------------


def _fused_forward_kernel(patches_ref, tokens_ref, w_ref, c_ref, mask_ref):
    """Whole MedSAM_Lite forward, VMEM-resident, no grid (<0.5 MiB total)."""

    def W(name):                               # static weight-slab view (bf16)
        o, r, n = _W_OFF[name]
        return w_ref[o:o + r, 0:n]

    def Cst(name):                             # static constant-slab view (f32)
        o, r, n = _C_OFF[name]
        return c_ref[o:o + r, 0:n]

    def mm(x_b16, wname, bname, act=None):
        y = jnp.dot(x_b16, W(wname), preferred_element_type=jnp.float32) + Cst(bname)
        if act == "gelu":
            # TODO(synk): PyTorch nn.GELU default is exact erf; tanh approx here.
            y = jax.nn.gelu(y, approximate=True)
        elif act == "relu":
            y = jnp.maximum(y, 0.0)
        return y

    def ln(x, name):                           # f32 LayerNorm, single-pass var
        gb = Cst(name)                         # row0 = gamma, row1 = beta
        mu = jnp.mean(x, axis=-1, keepdims=True)
        var = jnp.mean(x * x, axis=-1, keepdims=True) - mu * mu
        return (x - mu) * jax.lax.rsqrt(var + 1e-5) * gb[0:1, :] + gb[1:2, :]

    def attn(q, k, v, mask_name):
        # Block-diagonal batched attention with batch folded into rows; the
        # 0 / -1e30 batch mask is a precomputed constant (f32 softmax path).
        s = jax.lax.dot_general(
            q.astype(jnp.bfloat16), k.astype(jnp.bfloat16),
            dimension_numbers=(((1,), (1,)), ((), ())),
            preferred_element_type=jnp.float32) * (1.0 / math.sqrt(C))
        s = s + Cst(mask_name)
        s = s - jnp.max(s, axis=-1, keepdims=True)
        p = jnp.exp(s)
        p = p * pl.reciprocal(jnp.sum(p, axis=-1, keepdims=True), approx=True)
        # TODO(synk): real SAM decoder attention is multi-head with 1/sqrt(C/heads).
        return jnp.dot(p.astype(jnp.bfloat16), v.astype(jnp.bfloat16),
                       preferred_element_type=jnp.float32)

    bf = lambda x: x.astype(jnp.bfloat16)

    # ---- image encoder: patch embedding + one pre-LN MLP block ---------------
    t = mm(bf(patches_ref[...]), "patch_w", "patch_b")            # (B*HW, C)
    h = mm(bf(ln(t, "enc_ln1")), "enc_mlp_w1", "enc_mlp_b1", act="gelu")
    h = mm(bf(h), "enc_mlp_w2", "enc_mlp_b2")
    img = ln(t + h, "enc_ln2")
    # TODO(synk): the real TinyViT encoder has multiple stages / window attention.

    # ---- prompt encoder dense branch ("no mask" embedding) -------------------
    src = img + Cst("no_mask")

    # ---- mask decoder: token self-attention (fused QKV) ----------------------
    tok = tokens_ref[...]                      # (B*T_TOK, C): [iou, mask x4, corners x2]
    qkv = mm(bf(tok), "sa_wqkv", "sa_bqkv")
    a = attn(qkv[:, 0:C], qkv[:, C:2 * C], qkv[:, 2 * C:3 * C], "mask_self")
    tok = ln(tok + mm(bf(a), "sa_wo", "sa_bo"), "dec_ln1")

    # ---- fused src projection: [K | V | up1] in one (32,128) matmul ----------
    src_proj = mm(bf(src), "w_src", "b_src")
    k = src_proj[:, 0:C] + Cst("pos_k")        # + image_pe @ ca_wk (precomputed)
    v = src_proj[:, C:2 * C]
    up1 = jax.nn.gelu(src_proj[:, 2 * C:4 * C], approximate=True)   # (B*HW, 4*UP_C1)

    # ---- token -> image cross-attention ---------------------------------------
    q = mm(bf(tok), "ca_wq", "ca_bq")
    a = attn(q, k, v, "mask_cross")
    tok = ln(tok + mm(bf(a), "ca_wo", "ca_bo"), "dec_ln2")

    # ---- token MLP -------------------------------------------------------------
    h = mm(bf(tok), "dec_mlp_w1", "dec_mlp_b1", act="relu")
    h = mm(bf(h), "dec_mlp_w2", "dec_mlp_b2")
    tok = ln(tok + h, "dec_ln3")
    # TODO(synk): full SAM TwoWayTransformer has 2 layers + image->token attention.
    # IoU head omitted: MedSAM_Lite.forward() discards iou_predictions.

    # ---- hypernetwork (mask token 0); last layer pre-tiled to 128 lanes -------
    hh = mm(bf(tok), "hyp_w1", "hyp_b1", act="relu")
    hh = mm(bf(hh), "hyp_w2", "hyp_b2", act="relu")
    hyper = mm(bf(hh), "hyp_w3_t", "hyp_b3_t")                    # (B*T_TOK, 128)

    # ---- second ConvTranspose2d(k=2,s=2) as one block-diagonal matmul ---------
    u2 = mm(bf(up1), "up2_wb", "up2_bb", act="gelu")              # (B*HW, 128)

    # ---- hypernetwork product: broadcast each batch's mask-token-0 row over its
    #      HW block, one full-width VPU multiply, one lane-dense unmasked store.
    hyp_full = jnp.concatenate(
        [jnp.broadcast_to(hyper[b * T_TOK + 1:b * T_TOK + 2, :], (HW, OUT_W))
         for b in range(B)], axis=0)                              # (B*HW, 128)
    mask_ref[...] = u2 * hyp_full


# ----------------------------- parameters --------------------------------------


def pe_encoding(coords01, gauss):
    """Random-fourier positional encoding; coords01 in [0,1], returns (..., C)."""
    c = 2.0 * coords01 - 1.0
    c = 2.0 * jnp.pi * (c @ gauss)
    return jnp.concatenate([jnp.sin(c), jnp.cos(c)], axis=-1)


def init_params(key):
    ks = iter(jax.random.split(key, 32))

    def nrm(shape, scale=0.02):
        return jax.random.normal(next(ks), shape, dtype=jnp.float32) * scale

    def zeros(n):
        return jnp.zeros((1, n), jnp.float32)

    def lnp():                                  # (2, C): row0 gamma=1, row1 beta=0
        return jnp.concatenate(
            [jnp.ones((1, C), jnp.float32), jnp.zeros((1, C), jnp.float32)], axis=0)

    raw = {}
    # ---- image encoder (patch embed + one pre-LN MLP block) ----
    raw["patch_w"], raw["patch_b"] = nrm((IN_CH * PATCH * PATCH, C)), zeros(C)
    raw["enc_ln1"], raw["enc_ln2"] = lnp(), lnp()
    raw["enc_mlp_w1"], raw["enc_mlp_b1"] = nrm((C, MLP_HID)), zeros(MLP_HID)
    raw["enc_mlp_w2"], raw["enc_mlp_b2"] = nrm((MLP_HID, C)), zeros(C)

    # ---- prompt encoder ----
    gauss = jax.random.normal(next(ks), (2, NUM_POS_FEATS), jnp.float32)
    pe2, pe3 = nrm((C,)), nrm((C,))                       # box corner type embeddings
    corner_bias = jnp.tile(jnp.stack([pe2, pe3], axis=0), (B, 1))          # (2B, C)
    raw["no_mask"] = nrm((1, C))
    # image positional encoding (get_dense_pe): depends only on params -> only its
    # key-projection (dense_pe @ ca_wk) is needed, precomputed below as "pos_k".
    ys = (jnp.arange(GRID, dtype=jnp.float32) + 0.5) / GRID
    gy, gx = jnp.meshgrid(ys, ys, indexing="ij")
    coords = jnp.stack([gx, gy], axis=-1).reshape(HW, 2)
    dense_pe = jnp.tile(pe_encoding(coords, gauss), (B, 1))                # (B*HW, C)

    # ---- mask decoder tokens ----
    iou_token, mask_tokens = nrm((1, C)), nrm((NUM_MASK_TOKENS, C))
    tokens_base = jnp.concatenate([iou_token, mask_tokens], axis=0)        # (5, C)

    # ---- attention projections (fused QKV for token self-attention) ----
    raw["sa_wqkv"], raw["sa_bqkv"] = nrm((C, 3 * C)), zeros(3 * C)
    raw["sa_wo"], raw["sa_bo"] = nrm((C, C)), zeros(C)
    ca = {m: (nrm((C, C)), zeros(C)) for m in ("q", "k", "v", "o")}
    raw["ca_wq"], raw["ca_bq"] = ca["q"]
    raw["ca_wo"], raw["ca_bo"] = ca["o"]
    raw["dec_ln1"], raw["dec_ln2"], raw["dec_ln3"] = lnp(), lnp(), lnp()
    raw["dec_mlp_w1"], raw["dec_mlp_b1"] = nrm((C, MLP_HID)), zeros(MLP_HID)
    raw["dec_mlp_w2"], raw["dec_mlp_b2"] = nrm((MLP_HID, C)), zeros(C)

    # ---- output upscaling: two ConvTranspose2d(k=2, s=2) as per-pixel linears.
    # Column order is (kH, kW, c_out).
    # TODO(synk): permute from PyTorch's (c_in, c_out, kH, kW) when loading real weights.
    up1_w, up1_b = nrm((C, 4 * UP_C1)), zeros(4 * UP_C1)
    up2_w = nrm((UP_C1, 4 * UP_C2))
    raw["up2_wb"] = jax.scipy.linalg.block_diag(*([up2_w] * 4))   # (4*UP_C1, 16*UP_C2)
    raw["up2_bb"] = zeros(OUT_W)

    # fused src projection [ca_wk | ca_wv | up1_w] + precomputed image-PE key term
    ca_wk, ca_bk = ca["k"]
    ca_wv, ca_bv = ca["v"]
    raw["w_src"] = jnp.concatenate([ca_wk, ca_wv, up1_w], axis=1)          # (C, 128)
    raw["b_src"] = jnp.concatenate([ca_bk, ca_bv, up1_b], axis=1)          # (1, 128)
    raw["pos_k"] = dense_pe @ ca_wk                                        # (B*HW, C)

    # ---- hyper-network MLP (mask token 0); last layer tiled over the 16 groups
    raw["hyp_w1"], raw["hyp_b1"] = nrm((C, C)), zeros(C)
    raw["hyp_w2"], raw["hyp_b2"] = nrm((C, C)), zeros(C)
    hyp_w3, hyp_b3 = nrm((C, UP_C2)), zeros(UP_C2)
    raw["hyp_w3_t"] = jnp.tile(hyp_w3, (1, 16))                            # (C, 128)
    raw["hyp_b3_t"] = jnp.tile(hyp_b3, (1, 16))                            # (1, 128)

    # ---- additive block-diagonal attention masks for the folded-batch layout --
    tok_b = jnp.repeat(jnp.arange(B), T_TOK)
    img_b = jnp.repeat(jnp.arange(B), HW)
    raw["mask_self"] = jnp.where(tok_b[:, None] == tok_b[None, :], 0.0, -1e30)
    raw["mask_cross"] = jnp.where(tok_b[:, None] == img_b[None, :], 0.0, -1e30)

    return {
        "w_slab": _pack(raw, _W_ITEMS, 16, jnp.bfloat16),   # one bf16 weight DMA
        "c_slab": _pack(raw, _C_ITEMS, 8, jnp.float32),     # one f32 constant DMA
        "pe_gauss": gauss,
        "corner_bias": corner_bias,
        "tokens_base": tokens_base,
    }


# ----------------------------- MedSAM_Lite forward ----------------------------


def medsam_lite_forward(image, box_np, params):
    """image: (B, IN_CH, IMG, IMG) NCHW; box_np: (B, 4) xyxy -> (B, 1, IMG, IMG)."""
    # patch extraction to token-major layout (feature order (c, ky, kx) matches
    # PyTorch conv weight flattening); single tiny XLA transpose feeding the kernel.
    x = image.reshape(B, IN_CH, GRID, PATCH, GRID, PATCH)
    patches = jnp.transpose(x, (0, 2, 4, 1, 3, 5)).reshape(
        B * HW, IN_CH * PATCH * PATCH)

    # prompt encoder sparse branch: box-corner random-fourier PE + type embeddings
    coords = (box_np.reshape(B * 2, 2) + 0.5) / IMG
    sparse = pe_encoding(coords, params["pe_gauss"]) + params["corner_bias"]  # (2B, C)

    # decoder token sequence per batch: [iou, mask x4, box-corner x2]
    tokens = jnp.concatenate(
        [jnp.concatenate([params["tokens_base"], sparse[2 * b:2 * b + 2]], axis=0)
         for b in range(B)], axis=0)                                          # (B*7, C)

    # Single no-grid call: whole forward + weights fit in <0.5 MiB of VMEM.
    # TODO(synk): at real MedSAM sizes add a grid over B / HW tiles with
    # dimension_semantics=("parallel",) so v7x's second TensorCore is used.
    prod = pl.pallas_call(
        _fused_forward_kernel,
        out_shape=jax.ShapeDtypeStruct((B * HW, OUT_W), jnp.float32),
    )(patches, tokens, params["w_slab"], params["c_slab"])

    # hypernetwork channel reduction + pixel-unshuffle back to NCHW (tiny, in XLA):
    # columns are (dy0, dx0, dy1, dx1, c2); rows are (b, y0, x0).
    low = prod.reshape(B, GRID, GRID, 2, 2, 2, 2, UP_C2).sum(axis=-1)
    low = jnp.transpose(low, (0, 1, 3, 5, 2, 4, 6)).reshape(B, 1, IMG, IMG)
    return low


# ----------------------------- main -------------------------------------------

if __name__ == "__main__":
    key = jax.random.PRNGKey(0)
    k_img, k_par = jax.random.split(key)
    image = jax.random.normal(k_img, (B, IN_CH, IMG, IMG), dtype=jnp.float32)  # NCHW
    box_np = jnp.asarray([[2.0, 3.0, 12.0, 13.0],
                          [1.0, 1.0, 10.0, 14.0]], dtype=jnp.float32)          # (B, 4)
    params = init_params(k_par)

    low_res_masks = jax.jit(medsam_lite_forward)(image, box_np, params)
    jax.block_until_ready(low_res_masks)
    assert low_res_masks.shape == (B, 1, IMG, IMG)
    assert low_res_masks.dtype == jnp.float32
    assert bool(jnp.all(jnp.isfinite(low_res_masks)))
    print("KERNEL_OK")
</pallas_src>

<mosaic_0001>
module attributes {stable_mosaic.version = 11 : i64} {
  func.func @_fused_forward_kernel(%arg0: memref<32x48xf32, #tpu.memory_space<vmem>>, %arg1: memref<14x32xf32, #tpu.memory_space<vmem>>, %arg2: memref<560x128xbf16, #tpu.memory_space<vmem>>, %arg3: memref<224x128xf32, #tpu.memory_space<vmem>>, %arg4: memref<32x128xf32, #tpu.memory_space<vmem>>) attributes {dimension_semantics = [], scalar_prefetch = 0 : i64, scratch_operands = 0 : i64, tpu.core_type = #tpu.core_type<tc>} {
    %c0 = arith.constant 0 : index
    %c0_0 = arith.constant 0 : index
    %0 = vector.load %arg0[%c0, %c0_0] : memref<32x48xf32, #tpu.memory_space<vmem>>, vector<32x48xf32>
    %1 = arith.truncf %0 : vector<32x48xf32> to vector<32x48xbf16>
    %c0_1 = arith.constant 0 : index
    %c0_2 = arith.constant 0 : index
    %2 = vector.load %arg2[%c0_1, %c0_2] : memref<560x128xbf16, #tpu.memory_space<vmem>>, vector<48x32xbf16>
    %cst = arith.constant dense<0.000000e+00> : vector<32x32xf32>
    %3 = tpu.matmul %1, %2, %cst {dimension_numbers = #tpu.dot_dimension_numbers<[1], [0], [0], [1], [0, 0, 1, 1], [], []>} : vector<32x48xbf16>, vector<48x32xbf16>, vector<32x32xf32> -> vector<32x32xf32>
    %c0_3 = arith.constant 0 : index
    %c0_4 = arith.constant 0 : index
    %4 = vector.load %arg3[%c0_3, %c0_4] : memref<224x128xf32, #tpu.memory_space<vmem>>, vector<1x32xf32>
    %5 = vector.broadcast %4 : vector<1x32xf32> to vector<32x32xf32>
    %6 = arith.addf %3, %5 : vector<32x32xf32>
    %c8 = arith.constant 8 : index
    %c0_5 = arith.constant 0 : index
    %7 = vector.load %arg3[%c8, %c0_5] : memref<224x128xf32, #tpu.memory_space<vmem>>, vector<2x32xf32>
    %cst_6 = arith.constant dense<0.000000e+00> : vector<32xf32>
    %8 = vector.multi_reduction <add>, %6, %cst_6 [1] : vector<32x32xf32> to vector<32xf32>
    %9 = vector.shape_cast %8 : vector<32xf32> to vector<32x1xf32>
    %cst_7 = arith.constant 3.200000e+01 : f32
    %10 = vector.broadcast %cst_7 : f32 to vector<32x1xf32>
    %11 = arith.divf %9, %10 : vector<32x1xf32>
    %12 = arith.mulf %6, %6 : vector<32x32xf32>
    %cst_8 = arith.constant dense<0.000000e+00> : vector<32xf32>
    %13 = vector.multi_reduction <add>, %12, %cst_8 [1] : vector<32x32xf32> to vector<32xf32>
    %14 = vector.shape_cast %13 : vector<32xf32> to vector<32x1xf32>
    %cst_9 = arith.constant 3.200000e+01 : f32
    %15 = vector.broadcast %cst_9 : f32 to vector<32x1xf32>
    %16 = arith.divf %14, %15 : vector<32x1xf32>
    %17 = arith.mulf %11, %11 : vector<32x1xf32>
    %18 = arith.subf %16, %17 : vector<32x1xf32>
    %19 = vector.broadcast %11 : vector<32x1xf32> to vector<32x32xf32>
    %20 = arith.subf %6, %19 : vector<32x32xf32>
    %cst_10 = arith.constant 9.99999974E-6 : f32
    %21 = vector.broadcast %cst_10 : f32 to vector<32x1xf32>
    %22 = arith.addf %18, %21 : vector<32x1xf32>
    %23 = math.rsqrt %22 : vector<32x1xf32>
    %24 = vector.broadcast %23 : vector<32x1xf32> to vector<32x32xf32>
    %25 = arith.mulf %20, %24 : vector<32x32xf32>
    %26 = vector.extract_strided_slice %7 {offsets = [0, 0], sizes = [1, 32], strides = [1, 1]} : vector<2x32xf32> to vector<1x32xf32>
    %27 = vector.broadcast %26 : vector<1x32xf32> to vector<32x32xf32>
    %28 = arith.mulf %25, %27 : vector<32x32xf32>
    %29 = vector.extract_strided_slice %7 {offsets = [1, 0], sizes = [1, 32], strides = [1, 1]} : vector<2x32xf32> to vector<1x32xf32>
    %30 = vector.broadcast %29 : vector<1x32xf32> to vector<32x32xf32>
    %31 = arith.addf %28, %30 : vector<32x32xf32>
    %32 = arith.truncf %31 : vector<32x32xf32> to vector<32x32xbf16>
    %c48 = arith.constant 48 : index
    %c0_11 = arith.constant 0 : index
    %33 = vector.load %arg2[%c48, %c0_11] : memref<560x128xbf16, #tpu.memory_space<vmem>>, vector<32x64xbf16>
    %cst_12 = arith.constant dense<0.000000e+00> : vector<32x64xf32>
    %34 = tpu.matmul %32, %33, %cst_12 {dimension_numbers = #tpu.dot_dimension_numbers<[1], [0], [0], [1], [0, 0, 1, 1], [], []>} : vector<32x32xbf16>, vector<32x64xbf16>, vector<32x64xf32> -> vector<32x64xf32>
    %c16 = arith.constant 16 : index
    %c0_13 = arith.constant 0 : index
    %35 = vector.load %arg3[%c16, %c0_13] : memref<224x128xf32, #tpu.memory_space<vmem>>, vector<1x64xf32>
    %36 = vector.broadcast %35 : vector<1x64xf32> to vector<32x64xf32>
    %37 = arith.addf %34, %36 : vector<32x64xf32>
    %38 = arith.mulf %37, %37 : vector<32x64xf32>
    %39 = arith.mulf %37, %38 : vector<32x64xf32>
    %cst_14 = arith.constant 4.471500e-02 : f32
    %40 = vector.broadcast %cst_14 : f32 to vector<32x64xf32>
    %41 = arith.mulf %40, %39 : vector<32x64xf32>
    %42 = arith.addf %37, %41 : vector<32x64xf32>
    %cst_15 = arith.constant 0.797884583 : f32
    %43 = vector.broadcast %cst_15 : f32 to vector<32x64xf32>
    %44 = arith.mulf %43, %42 : vector<32x64xf32>
    %45 = math.tanh %44 : vector<32x64xf32>
    %cst_16 = arith.constant 1.000000e+00 : f32
    %46 = vector.broadcast %cst_16 : f32 to vector<32x64xf32>
    %47 = arith.addf %46, %45 : vector<32x64xf32>
    %cst_17 = arith.constant 5.000000e-01 : f32
    %48 = vector.broadcast %cst_17 : f32 to vector<32x64xf32>
    %49 = arith.mulf %48, %47 : vector<32x64xf32>
    %50 = arith.mulf %37, %49 : vector<32x64xf32>
    %51 = arith.truncf %50 : vector<32x64xf32> to vector<32x64xbf16>
    %c80 = arith.constant 80 : index
    %c0_18 = arith.constant 0 : index
    %52 = vector.load %arg2[%c80, %c0_18] : memref<560x128xbf16, #tpu.memory_space<vmem>>, vector<64x32xbf16>
    %cst_19 = arith.constant dense<0.000000e+00> : vector<32x32xf32>
    %53 = tpu.matmul %51, %52, %cst_19 {dimension_numbers = #tpu.dot_dimension_numbers<[1], [0], [0], [1], [0, 0, 1, 1], [], []>} : vector<32x64xbf16>, vector<64x32xbf16>, vector<32x32xf32> -> vector<32x32xf32>
    %c24 = arith.constant 24 : index
    %c0_20 = arith.constant 0 : index
    %54 = vector.load %arg3[%c24, %c0_20] : memref<224x128xf32, #tpu.memory_space<vmem>>, vector<1x32xf32>
    %55 = vector.broadcast %54 : vector<1x32xf32> to vector<32x32xf32>
    %56 = arith.addf %53, %55 : vector<32x32xf32>
    %57 = arith.addf %6, %56 : vector<32x32xf32>
    %c32 = arith.constant 32 : index
    %c0_21 = arith.constant 0 : index
    %58 = vector.load %arg3[%c32, %c0_21] : memref<224x128xf32, #tpu.memory_space<vmem>>, vector<2x32xf32>
    %cst_22 = arith.constant dense<0.000000e+00> : vector<32xf32>
    %59 = vector.multi_reduction <add>, %57, %cst_22 [1] : vector<32x32xf32> to vector<32xf32>
    %60 = vector.shape_cast %59 : vector<32xf32> to vector<32x1xf32>
    %cst_23 = arith.constant 3.200000e+01 : f32
    %61 = vector.broadcast %cst_23 : f32 to vector<32x1xf32>
    %62 = arith.divf %60, %61 : vector<32x1xf32>
    %63 = arith.mulf %57, %57 : vector<32x32xf32>
    %cst_24 = arith.constant dense<0.000000e+00> : vector<32xf32>
    %64 = vector.multi_reduction <add>, %63, %cst_24 [1] : vector<32x32xf32> to vector<32xf32>
    %65 = vector.shape_cast %64 : vector<32xf32> to vector<32x1xf32>
    %cst_25 = arith.constant 3.200000e+01 : f32
    %66 = vector.broadcast %cst_25 : f32 to vector<32x1xf32>
    %67 = arith.divf %65, %66 : vector<32x1xf32>
    %68 = arith.mulf %62, %62 : vector<32x1xf32>
    %69 = arith.subf %67, %68 : vector<32x1xf32>
    %70 = vector.broadcast %62 : vector<32x1xf32> to vector<32x32xf32>
    %71 = arith.subf %57, %70 : vector<32x32xf32>
    %cst_26 = arith.constant 9.99999974E-6 : f32
    %72 = vector.broadcast %cst_26 : f32 to vector<32x1xf32>
    %73 = arith.addf %69, %72 : vector<32x1xf32>
    %74 = math.rsqrt %73 : vector<32x1xf32>
    %75 = vector.broadcast %74 : vector<32x1xf32> to vector<32x32xf32>
    %76 = arith.mulf %71, %75 : vector<32x32xf32>
    %77 = vector.extract_strided_slice %58 {offsets = [0, 0], sizes = [1, 32], strides = [1, 1]} : vector<2x32xf32> to vector<1x32xf32>
    %78 = vector.broadcast %77 : vector<1x32xf32> to vector<32x32xf32>
    %79 = arith.mulf %76, %78 : vector<32x32xf32>
    %80 = vector.extract_strided_slice %58 {offsets = [1, 0], sizes = [1, 32], strides = [1, 1]} : vector<2x32xf32> to vector<1x32xf32>
    %81 = vector.broadcast %80 : vector<1x32xf32> to vector<32x32xf32>
    %82 = arith.addf %79, %81 : vector<32x32xf32>
    %c40 = arith.constant 40 : index
    %c0_27 = arith.constant 0 : index
    %83 = vector.load %arg3[%c40, %c0_27] : memref<224x128xf32, #tpu.memory_space<vmem>>, vector<1x32xf32>
    %84 = vector.broadcast %83 : vector<1x32xf32> to vector<32x32xf32>
    %85 = arith.addf %82, %84 : vector<32x32xf32>
    %c0_28 = arith.constant 0 : index
    %c0_29 = arith.constant 0 : index
    %86 = vector.load %arg1[%c0_28, %c0_29] : memref<14x32xf32, #tpu.memory_space<vmem>>, vector<14x32xf32>
    %87 = arith.truncf %86 : vector<14x32xf32> to vector<14x32xbf16>
    %c144 = arith.constant 144 : index
    %c0_30 = arith.constant 0 : index
    %88 = vector.load %arg2[%c144, %c0_30] : memref<560x128xbf16, #tpu.memory_space<vmem>>, vector<32x96xbf16>
    %cst_31 = arith.constant dense<0.000000e+00> : vector<14x96xf32>
    %89 = tpu.matmul %87, %88, %cst_31 {dimension_numbers = #tpu.dot_dimension_numbers<[1], [0], [0], [1], [0, 0, 1, 1], [], []>} : vector<14x32xbf16>, vector<32x96xbf16>, vector<14x96xf32> -> vector<14x96xf32>
    %c48_32 = arith.constant 48 : index
    %c0_33 = arith.constant 0 : index
    %90 = vector.load %arg3[%c48_32, %c0_33] : memref<224x128xf32, #tpu.memory_space<vmem>>, vector<1x96xf32>
    %91 = vector.broadcast %90 : vector<1x96xf32> to vector<14x96xf32>
    %92 = arith.addf %89, %91 : vector<14x96xf32>
    %93 = vector.extract_strided_slice %92 {offsets = [0, 0], sizes = [14, 32], strides = [1, 1]} : vector<14x96xf32> to vector<14x32xf32>
    %94 = vector.extract_strided_slice %92 {offsets = [0, 32], sizes = [14, 32], strides = [1, 1]} : vector<14x96xf32> to vector<14x32xf32>
    %95 = vector.extract_strided_slice %92 {offsets = [0, 64], sizes = [14, 32], strides = [1, 1]} : vector<14x96xf32> to vector<14x32xf32>
    %96 = arith.truncf %93 : vector<14x32xf32> to vector<14x32xbf16>
    %97 = arith.truncf %94 : vector<14x32xf32> to vector<14x32xbf16>
    %cst_34 = arith.constant dense<0.000000e+00> : vector<14x14xf32>
    %98 = tpu.matmul %96, %97, %cst_34 {dimension_numbers = #tpu.dot_dimension_numbers<[1], [1], [0], [0], [0, 0, 1, 0], [], []>} : vector<14x32xbf16>, vector<14x32xbf16>, vector<14x14xf32> -> vector<14x14xf32>
    %cst_35 = arith.constant 0.176776692 : f32
    %99 = vector.broadcast %cst_35 : f32 to vector<14x14xf32>
    %100 = arith.mulf %98, %99 : vector<14x14xf32>
    %c192 = arith.constant 192 : index
    %c0_36 = arith.constant 0 : index
    %101 = vector.load %arg3[%c192, %c0_36] : memref<224x128xf32, #tpu.memory_space<vmem>>, vector<14x14xf32>
    %102 = arith.addf %100, %101 : vector<14x14xf32>
    %cst_37 = arith.constant dense<0xFF800000> : vector<14xf32>
    %103 = vector.multi_reduction <maximumf>, %102, %cst_37 [1] : vector<14x14xf32> to vector<14xf32>
    %104 = vector.shape_cast %103 : vector<14xf32> to vector<14x1xf32>
    %105 = vector.broadcast %104 : vector<14x1xf32> to vector<14x14xf32>
    %106 = arith.subf %102, %105 : vector<14x14xf32>
    %107 = math.exp %106 : vector<14x14xf32>
    %cst_38 = arith.constant dense<0.000000e+00> : vector<14xf32>
    %108 = vector.multi_reduction <add>, %107, %cst_38 [1] : vector<14x14xf32> to vector<14xf32>
    %109 = vector.shape_cast %108 : vector<14xf32> to vector<14x1xf32>
    %110 = tpu.reciprocal %109 {approx = true} : vector<14x1xf32> -> vector<14x1xf32>
    %111 = vector.broadcast %110 : vector<14x1xf32> to vector<14x14xf32>
    %112 = arith.mulf %107, %111 : vector<14x14xf32>
    %113 = arith.truncf %112 : vector<14x14xf32> to vector<14x14xbf16>
    %114 = arith.truncf %95 : vector<14x32xf32> to vector<14x32xbf16>
    %cst_39 = arith.constant dense<0.000000e+00> : vector<14x32xf32>
    %115 = tpu.matmul %113, %114, %cst_39 {dimension_numbers = #tpu.dot_dimension_numbers<[1], [0], [0], [1], [0, 0, 1, 1], [], []>} : vector<14x14xbf16>, vector<14x32xbf16>, vector<14x32xf32> -> vector<14x32xf32>
    %116 = arith.truncf %115 : vector<14x32xf32> to vector<14x32xbf16>
    %c176 = arith.constant 176 : index
    %c0_40 = arith.constant 0 : index
    %117 = vector.load %arg2[%c176, %c0_40] : memref<560x128xbf16, #tpu.memory_space<vmem>>, vector<32x32xbf16>
    %cst_41 = arith.constant dense<0.000000e+00> : vector<14x32xf32>
    %118 = tpu.matmul %116, %117, %cst_41 {dimension_numbers = #tpu.dot_dimension_numbers<[1], [0], [0], [1], [0, 0, 1, 1], [], []>} : vector<14x32xbf16>, vector<32x32xbf16>, vector<14x32xf32> -> vector<14x32xf32>
    %c56 = arith.constant 56 : index
    %c0_42 = arith.constant 0 : index
    %119 = vector.load %arg3[%c56, %c0_42] : memref<224x128xf32, #tpu.memory_space<vmem>>, vector<1x32xf32>
    %120 = vector.broadcast %119 : vector<1x32xf32> to vector<14x32xf32>
    %121 = arith.addf %118, %120 : vector<14x32xf32>
    %122 = arith.addf %86, %121 : vector<14x32xf32>
    %c64 = arith.constant 64 : index
    %c0_43 = arith.constant 0 : index
    %123 = vector.load %arg3[%c64, %c0_43] : memref<224x128xf32, #tpu.memory_space<vmem>>, vector<2x32xf32>
    %cst_44 = arith.constant dense<0.000000e+00> : vector<14xf32>
    %124 = vector.multi_reduction <add>, %122, %cst_44 [1] : vector<14x32xf32> to vector<14xf32>
    %125 = vector.shape_cast %124 : vector<14xf32> to vector<14x1xf32>
    %cst_45 = arith.constant 3.200000e+01 : f32
    %126 = vector.broadcast %cst_45 : f32 to vector<14x1xf32>
    %127 = arith.divf %125, %126 : vector<14x1xf32>
    %128 = arith.mulf %122, %122 : vector<14x32xf32>
    %cst_46 = arith.constant dense<0.000000e+00> : vector<14xf32>
    %129 = vector.multi_reduction <add>, %128, %cst_46 [1] : vector<14x32xf32> to vector<14xf32>
    %130 = vector.shape_cast %129 : vector<14xf32> to vector<14x1xf32>
    %cst_47 = arith.constant 3.200000e+01 : f32
    %131 = vector.broadcast %cst_47 : f32 to vector<14x1xf32>
    %132 = arith.divf %130, %131 : vector<14x1xf32>
    %133 = arith.mulf %127, %127 : vector<14x1xf32>
    %134 = arith.subf %132, %133 : vector<14x1xf32>
    %135 = vector.broadcast %127 : vector<14x1xf32> to vector<14x32xf32>
    %136 = arith.subf %122, %135 : vector<14x32xf32>
    %cst_48 = arith.constant 9.99999974E-6 : f32
    %137 = vector.broadcast %cst_48 : f32 to vector<14x1xf32>
    %138 = arith.addf %134, %137 : vector<14x1xf32>
    %139 = math.rsqrt %138 : vector<14x1xf32>
    %140 = vector.broadcast %139 : vector<14x1xf32> to vector<14x32xf32>
    %141 = arith.mulf %136, %140 : vector<14x32xf32>
    %142 = vector.extract_strided_slice %123 {offsets = [0, 0], sizes = [1, 32], strides = [1, 1]} : vector<2x32xf32> to vector<1x32xf32>
    %143 = vector.broadcast %142 : vector<1x32xf32> to vector<14x32xf32>
    %144 = arith.mulf %141, %143 : vector<14x32xf32>
    %145 = vector.extract_strided_slice %123 {offsets = [1, 0], sizes = [1, 32], strides = [1, 1]} : vector<2x32xf32> to vector<1x32xf32>
    %146 = vector.broadcast %145 : vector<1x32xf32> to vector<14x32xf32>
    %147 = arith.addf %144, %146 : vector<14x32xf32>
    %148 = arith.truncf %85 : vector<32x32xf32> to vector<32x32xbf16>
    %c240 = arith.constant 240 : index
    %c0_49 = arith.constant 0 : index
    %149 = vector.load %arg2[%c240, %c0_49] : memref<560x128xbf16, #tpu.memory_space<vmem>>, vector<32x128xbf16>
    %cst_50 = arith.constant dense<0.000000e+00> : vector<32x128xf32>
    %150 = tpu.matmul %148, %149, %cst_50 {dimension_numbers = #tpu.dot_dimension_numbers<[1], [0], [0], [1], [0, 0, 1, 1], [], []>} : vector<32x32xbf16>, vector<32x128xbf16>, vector<32x128xf32> -> vector<32x128xf32>
    %c80_51 = arith.constant 80 : index
    %c0_52 = arith.constant 0 : index
    %151 = vector.load %arg3[%c80_51, %c0_52] : memref<224x128xf32, #tpu.memory_space<vmem>>, vector<1x128xf32>
    %152 = vector.broadcast %151 : vector<1x128xf32> to vector<32x128xf32>
    %153 = arith.addf %150, %152 : vector<32x128xf32>
    %154 = vector.extract_strided_slice %153 {offsets = [0, 0], sizes = [32, 32], strides = [1, 1]} : vector<32x128xf32> to vector<32x32xf32>
    %c160 = arith.constant 160 : index
    %c0_53 = arith.constant 0 : index
    %155 = vector.load %arg3[%c160, %c0_53] : memref<224x128xf32, #tpu.memory_space<vmem>>, vector<32x32xf32>
    %156 = arith.addf %154, %155 : vector<32x32xf32>
    %157 = vector.extract_strided_slice %153 {offsets = [0, 32], sizes = [32, 32], strides = [1, 1]} : vector<32x128xf32> to vector<32x32xf32>
    %158 = vector.extract_strided_slice %153 {offsets = [0, 64], sizes = [32, 64], strides = [1, 1]} : vector<32x128xf32> to vector<32x64xf32>
    %159 = arith.mulf %158, %158 : vector<32x64xf32>
    %160 = arith.mulf %158, %159 : vector<32x64xf32>
    %cst_54 = arith.constant 4.471500e-02 : f32
    %161 = vector.broadcast %cst_54 : f32 to vector<32x64xf32>
    %162 = arith.mulf %161, %160 : vector<32x64xf32>
    %163 = arith.addf %158, %162 : vector<32x64xf32>
    %cst_55 = arith.constant 0.797884583 : f32
    %164 = vector.broadcast %cst_55 : f32 to vector<32x64xf32>
    %165 = arith.mulf %164, %163 : vector<32x64xf32>
    %166 = math.tanh %165 : vector<32x64xf32>
    %cst_56 = arith.constant 1.000000e+00 : f32
    %167 = vector.broadcast %cst_56 : f32 to vector<32x64xf32>
    %168 = arith.addf %167, %166 : vector<32x64xf32>
    %cst_57 = arith.constant 5.000000e-01 : f32
    %169 = vector.broadcast %cst_57 : f32 to vector<32x64xf32>
    %170 = arith.mulf %169, %168 : vector<32x64xf32>
    %171 = arith.mulf %158, %170 : vector<32x64xf32>
    %172 = arith.truncf %147 : vector<14x32xf32> to vector<14x32xbf16>
    %c208 = arith.constant 208 : index
    %c0_58 = arith.constant 0 : index
    %173 = vector.load %arg2[%c208, %c0_58] : memref<560x128xbf16, #tpu.memory_space<vmem>>, vector<32x32xbf16>
    %cst_59 = arith.constant dense<0.000000e+00> : vector<14x32xf32>
    %174 = tpu.matmul %172, %173, %cst_59 {dimension_numbers = #tpu.dot_dimension_numbers<[1], [0], [0], [1], [0, 0, 1, 1], [], []>} : vector<14x32xbf16>, vector<32x32xbf16>, vector<14x32xf32> -> vector<14x32xf32>
    %c72 = arith.constant 72 : index
    %c0_60 = arith.constant 0 : index
    %175 = vector.load %arg3[%c72, %c0_60] : memref<224x128xf32, #tpu.memory_space<vmem>>, vector<1x32xf32>
    %176 = vector.broadcast %175 : vector<1x32xf32> to vector<14x32xf32>
    %177 = arith.addf %174, %176 : vector<14x32xf32>
    %178 = arith.truncf %177 : vector<14x32xf32> to vector<14x32xbf16>
    %179 = arith.truncf %156 : vector<32x32xf32> to vector<32x32xbf16>
    %cst_61 = arith.constant dense<0.000000e+00> : vector<14x32xf32>
    %180 = tpu.matmul %178, %179, %cst_61 {dimension_numbers = #tpu.dot_dimension_numbers<[1], [1], [0], [0], [0, 0, 1, 0], [], []>} : vector<14x32xbf16>, vector<32x32xbf16>, vector<14x32xf32> -> vector<14x32xf32>
    %cst_62 = arith.constant 0.176776692 : f32
    %181 = vector.broadcast %cst_62 : f32 to vector<14x32xf32>
    %182 = arith.mulf %180, %181 : vector<14x32xf32>
    %c208_63 = arith.constant 208 : index
    %c0_64 = arith.constant 0 : index
    %183 = vector.load %arg3[%c208_63, %c0_64] : memref<224x128xf32, #tpu.memory_space<vmem>>, vector<14x32xf32>
    %184 = arith.addf %182, %183 : vector<14x32xf32>
    %cst_65 = arith.constant dense<0xFF800000> : vector<14xf32>
    %185 = vector.multi_reduction <maximumf>, %184, %cst_65 [1] : vector<14x32xf32> to vector<14xf32>
    %186 = vector.shape_cast %185 : vector<14xf32> to vector<14x1xf32>
    %187 = vector.broadcast %186 : vector<14x1xf32> to vector<14x32xf32>
    %188 = arith.subf %184, %187 : vector<14x32xf32>
    %189 = math.exp %188 : vector<14x32xf32>
    %cst_66 = arith.constant dense<0.000000e+00> : vector<14xf32>
    %190 = vector.multi_reduction <add>, %189, %cst_66 [1] : vector<14x32xf32> to vector<14xf32>
    %191 = vector.shape_cast %190 : vector<14xf32> to vector<14x1xf32>
    %192 = tpu.reciprocal %191 {approx = true} : vector<14x1xf32> -> vector<14x1xf32>
    %193 = vector.broadcast %192 : vector<14x1xf32> to vector<14x32xf32>
    %194 = arith.mulf %189, %193 : vector<14x32xf32>
    %195 = arith.truncf %194 : vector<14x32xf32> to vector<14x32xbf16>
    %196 = arith.truncf %157 : vector<32x32xf32> to vector<32x32xbf16>
    %cst_67 = arith.constant dense<0.000000e+00> : vector<14x32xf32>
    %197 = tpu.matmul %195, %196, %cst_67 {dimension_numbers = #tpu.dot_dimension_numbers<[1], [0], [0], [1], [0, 0, 1, 1], [], []>} : vector<14x32xbf16>, vector<32x32xbf16>, vector<14x32xf32> -> vector<14x32xf32>
    %198 = arith.truncf %197 : vector<14x32xf32> to vector<14x32xbf16>
    %c272 = arith.constant 272 : index
    %c0_68 = arith.constant 0 : index
    %199 = vector.load %arg2[%c272, %c0_68] : memref<560x128xbf16, #tpu.memory_space<vmem>>, vector<32x32xbf16>
    %cst_69 = arith.constant dense<0.000000e+00> : vector<14x32xf32>
    %200 = tpu.matmul %198, %199, %cst_69 {dimension_numbers = #tpu.dot_dimension_numbers<[1], [0], [0], [1], [0, 0, 1, 1], [], []>} : vector<14x32xbf16>, vector<32x32xbf16>, vector<14x32xf32> -> vector<14x32xf32>
    %c88 = arith.constant 88 : index
    %c0_70 = arith.constant 0 : index
    %201 = vector.load %arg3[%c88, %c0_70] : memref<224x128xf32, #tpu.memory_space<vmem>>, vector<1x32xf32>
    %202 = vector.broadcast %201 : vector<1x32xf32> to vector<14x32xf32>
    %203 = arith.addf %200, %202 : vector<14x32xf32>
    %204 = arith.addf %147, %203 : vector<14x32xf32>
    %c96 = arith.constant 96 : index
    %c0_71 = arith.constant 0 : index
    %205 = vector.load %arg3[%c96, %c0_71] : memref<224x128xf32, #tpu.memory_space<vmem>>, vector<2x32xf32>
    %cst_72 = arith.constant dense<0.000000e+00> : vector<14xf32>
    %206 = vector.multi_reduction <add>, %204, %cst_72 [1] : vector<14x32xf32> to vector<14xf32>
    %207 = vector.shape_cast %206 : vector<14xf32> to vector<14x1xf32>
    %cst_73 = arith.constant 3.200000e+01 : f32
    %208 = vector.broadcast %cst_73 : f32 to vector<14x1xf32>
    %209 = arith.divf %207, %208 : vector<14x1xf32>
    %210 = arith.mulf %204, %204 : vector<14x32xf32>
    %cst_74 = arith.constant dense<0.000000e+00> : vector<14xf32>
    %211 = vector.multi_reduction <add>, %210, %cst_74 [1] : vector<14x32xf32> to vector<14xf32>
    %212 = vector.shape_cast %211 : vector<14xf32> to vector<14x1xf32>
    %cst_75 = arith.constant 3.200000e+01 : f32
    %213 = vector.broadcast %cst_75 : f32 to vector<14x1xf32>
    %214 = arith.divf %212, %213 : vector<14x1xf32>
    %215 = arith.mulf %209, %209 : vector<14x1xf32>
    %216 = arith.subf %214, %215 : vector<14x1xf32>
    %217 = vector.broadcast %209 : vector<14x1xf32> to vector<14x32xf32>
    %218 = arith.subf %204, %217 : vector<14x32xf32>
    %cst_76 = arith.constant 9.99999974E-6 : f32
    %219 = vector.broadcast %cst_76 : f32 to vector<14x1xf32>
    %220 = arith.addf %216, %219 : vector<14x1xf32>
    %221 = math.rsqrt %220 : vector<14x1xf32>
    %222 = vector.broadcast %221 : vector<14x1xf32> to vector<14x32xf32>
    %223 = arith.mulf %218, %222 : vector<14x32xf32>
    %224 = vector.extract_strided_slice %205 {offsets = [0, 0], sizes = [1, 32], strides = [1, 1]} : vector<2x32xf32> to vector<1x32xf32>
    %225 = vector.broadcast %224 : vector<1x32xf32> to vector<14x32xf32>
    %226 = arith.mulf %223, %225 : vector<14x32xf32>
    %227 = vector.extract_strided_slice %205 {offsets = [1, 0], sizes = [1, 32], strides = [1, 1]} : vector<2x32xf32> to vector<1x32xf32>
    %228 = vector.broadcast %227 : vector<1x32xf32> to vector<14x32xf32>
    %229 = arith.addf %226, %228 : vector<14x32xf32>
    %230 = arith.truncf %229 : vector<14x32xf32> to vector<14x32xbf16>
    %c304 = arith.constant 304 : index
    %c0_77 = arith.constant 0 : index
    %231 = vector.load %arg2[%c304, %c0_77] : memref<560x128xbf16, #tpu.memory_space<vmem>>, vector<32x64xbf16>
    %cst_78 = arith.constant dense<0.000000e+00> : vector<14x64xf32>
    %232 = tpu.matmul %230, %231, %cst_78 {dimension_numbers = #tpu.dot_dimension_numbers<[1], [0], [0], [1], [0, 0, 1, 1], [], []>} : vector<14x32xbf16>, vector<32x64xbf16>, vector<14x64xf32> -> vector<14x64xf32>
    %c104 = arith.constant 104 : index
    %c0_79 = arith.constant 0 : index
    %233 = vector.load %arg3[%c104, %c0_79] : memref<224x128xf32, #tpu.memory_space<vmem>>, vector<1x64xf32>
    %234 = vector.broadcast %233 : vector<1x64xf32> to vector<14x64xf32>
    %235 = arith.addf %232, %234 : vector<14x64xf32>
    %cst_80 = arith.constant 0.000000e+00 : f32
    %236 = vector.broadcast %cst_80 : f32 to vector<14x64xf32>
    %237 = arith.maximumf %235, %236 : vector<14x64xf32>
    %238 = arith.truncf %237 : vector<14x64xf32> to vector<14x64xbf16>
    %c336 = arith.constant 336 : index
    %c0_81 = arith.constant 0 : index
    %239 = vector.load %arg2[%c336, %c0_81] : memref<560x128xbf16, #tpu.memory_space<vmem>>, vector<64x32xbf16>
    %cst_82 = arith.constant dense<0.000000e+00> : vector<14x32xf32>
    %240 = tpu.matmul %238, %239, %cst_82 {dimension_numbers = #tpu.dot_dimension_numbers<[1], [0], [0], [1], [0, 0, 1, 1], [], []>} : vector<14x64xbf16>, vector<64x32xbf16>, vector<14x32xf32> -> vector<14x32xf32>
    %c112 = arith.constant 112 : index
    %c0_83 = arith.constant 0 : index
    %241 = vector.load %arg3[%c112, %c0_83] : memref<224x128xf32, #tpu.memory_space<vmem>>, vector<1x32xf32>
    %242 = vector.broadcast %241 : vector<1x32xf32> to vector<14x32xf32>
    %243 = arith.addf %240, %242 : vector<14x32xf32>
    %244 = arith.addf %229, %243 : vector<14x32xf32>
    %c120 = arith.constant 120 : index
    %c0_84 = arith.constant 0 : index
    %245 = vector.load %arg3[%c120, %c0_84] : memref<224x128xf32, #tpu.memory_space<vmem>>, vector<2x32xf32>
    %cst_85 = arith.constant dense<0.000000e+00> : vector<14xf32>
    %246 = vector.multi_reduction <add>, %244, %cst_85 [1] : vector<14x32xf32> to vector<14xf32>
    %247 = vector.shape_cast %246 : vector<14xf32> to vector<14x1xf32>
    %cst_86 = arith.constant 3.200000e+01 : f32
    %248 = vector.broadcast %cst_86 : f32 to vector<14x1xf32>
    %249 = arith.divf %247, %248 : vector<14x1xf32>
    %250 = arith.mulf %244, %244 : vector<14x32xf32>
    %cst_87 = arith.constant dense<0.000000e+00> : vector<14xf32>
    %251 = vector.multi_reduction <add>, %250, %cst_87 [1] : vector<14x32xf32> to vector<14xf32>
    %252 = vector.shape_cast %251 : vector<14xf32> to vector<14x1xf32>
    %cst_88 = arith.constant 3.200000e+01 : f32
    %253 = vector.broadcast %cst_88 : f32 to vector<14x1xf32>
    %254 = arith.divf %252, %253 : vector<14x1xf32>
    %255 = arith.mulf %249, %249 : vector<14x1xf32>
    %256 = arith.subf %254, %255 : vector<14x1xf32>
    %257 = vector.broadcast %249 : vector<14x1xf32> to vector<14x32xf32>
    %258 = arith.subf %244, %257 : vector<14x32xf32>
    %cst_89 = arith.constant 9.99999974E-6 : f32
    %259 = vector.broadcast %cst_89 : f32 to vector<14x1xf32>
    %260 = arith.addf %256, %259 : vector<14x1xf32>
    %261 = math.rsqrt %260 : vector<14x1xf32>
    %262 = vector.broadcast %261 : vector<14x1xf32> to vector<14x32xf32>
    %263 = arith.mulf %258, %262 : vector<14x32xf32>
    %264 = vector.extract_strided_slice %245 {offsets = [0, 0], sizes = [1, 32], strides = [1, 1]} : vector<2x32xf32> to vector<1x32xf32>
    %265 = vector.broadcast %264 : vector<1x32xf32> to vector<14x32xf32>
    %266 = arith.mulf %263, %265 : vector<14x32xf32>
    %267 = vector.extract_strided_slice %245 {offsets = [1, 0], sizes = [1, 32], strides = [1, 1]} : vector<2x32xf32> to vector<1x32xf32>
    %268 = vector.broadcast %267 : vector<1x32xf32> to vector<14x32xf32>
    %269 = arith.addf %266, %268 : vector<14x32xf32>
    %270 = arith.truncf %269 : vector<14x32xf32> to vector<14x32xbf16>
    %c400 = arith.constant 400 : index
    %c0_90 = arith.constant 0 : index
    %271 = vector.load %arg2[%c400, %c0_90] : memref<560x128xbf16, #tpu.memory_space<vmem>>, vector<32x32xbf16>
    %cst_91 = arith.constant dense<0.000000e+00> : vector<14x32xf32>
    %272 = tpu.matmul %270, %271, %cst_91 {dimension_numbers = #tpu.dot_dimension_numbers<[1], [0], [0], [1], [0, 0, 1, 1], [], []>} : vector<14x32xbf16>, vector<32x32xbf16>, vector<14x32xf32> -> vector<14x32xf32>
    %c128 = arith.constant 128 : index
    %c0_92 = arith.constant 0 : index
    %273 = vector.load %arg3[%c128, %c0_92] : memref<224x128xf32, #tpu.memory_space<vmem>>, vector<1x32xf32>
    %274 = vector.broadcast %273 : vector<1x32xf32> to vector<14x32xf32>
    %275 = arith.addf %272, %274 : vector<14x32xf32>
    %cst_93 = arith.constant 0.000000e+00 : f32
    %276 = vector.broadcast %cst_93 : f32 to vector<14x32xf32>
    %277 = arith.maximumf %275, %276 : vector<14x32xf32>
    %278 = arith.truncf %277 : vector<14x32xf32> to vector<14x32xbf16>
    %c432 = arith.constant 432 : index
    %c0_94 = arith.constant 0 : index
    %279 = vector.load %arg2[%c432, %c0_94] : memref<560x128xbf16, #tpu.memory_space<vmem>>, vector<32x32xbf16>
    %cst_95 = arith.constant dense<0.000000e+00> : vector<14x32xf32>
    %280 = tpu.matmul %278, %279, %cst_95 {dimension_numbers = #tpu.dot_dimension_numbers<[1], [0], [0], [1], [0, 0, 1, 1], [], []>} : vector<14x32xbf16>, vector<32x32xbf16>, vector<14x32xf32> -> vector<14x32xf32>
    %c136 = arith.constant 136 : index
    %c0_96 = arith.constant 0 : index
    %281 = vector.load %arg3[%c136, %c0_96] : memref<224x128xf32, #tpu.memory_space<vmem>>, vector<1x32xf32>
    %282 = vector.broadcast %281 : vector<1x32xf32> to vector<14x32xf32>
    %283 = arith.addf %280, %282 : vector<14x32xf32>
    %cst_97 = arith.constant 0.000000e+00 : f32
    %284 = vector.broadcast %cst_97 : f32 to vector<14x32xf32>
    %285 = arith.maximumf %283, %284 : vector<14x32xf32>
    %286 = arith.truncf %285 : vector<14x32xf32> to vector<14x32xbf16>
    %c464 = arith.constant 464 : index
    %c0_98 = arith.constant 0 : index
    %287 = vector.load %arg2[%c464, %c0_98] : memref<560x128xbf16, #tpu.memory_space<vmem>>, vector<32x128xbf16>
    %cst_99 = arith.constant dense<0.000000e+00> : vector<14x128xf32>
    %288 = tpu.matmul %286, %287, %cst_99 {dimension_numbers = #tpu.dot_dimension_numbers<[1], [0], [0], [1], [0, 0, 1, 1], [], []>} : vector<14x32xbf16>, vector<32x128xbf16>, vector<14x128xf32> -> vector<14x128xf32>
    %c144_100 = arith.constant 144 : index
    %c0_101 = arith.constant 0 : index
    %289 = vector.load %arg3[%c144_100, %c0_101] : memref<224x128xf32, #tpu.memory_space<vmem>>, vector<1x128xf32>
    %290 = vector.broadcast %289 : vector<1x128xf32> to vector<14x128xf32>
    %291 = arith.addf %288, %290 : vector<14x128xf32>
    %292 = arith.truncf %171 : vector<32x64xf32> to vector<32x64xbf16>
    %c496 = arith.constant 496 : index
    %c0_102 = arith.constant 0 : index
    %293 = vector.load %arg2[%c496, %c0_102] : memref<560x128xbf16, #tpu.memory_space<vmem>>, vector<64x128xbf16>
    %cst_103 = arith.constant dense<0.000000e+00> : vector<32x128xf32>
    %294 = tpu.matmul %292, %293, %cst_103 {dimension_numbers = #tpu.dot_dimension_numbers<[1], [0], [0], [1], [0, 0, 1, 1], [], []>} : vector<32x64xbf16>, vector<64x128xbf16>, vector<32x128xf32> -> vector<32x128xf32>
    %c152 = arith.constant 152 : index
    %c0_104 = arith.constant 0 : index
    %295 = vector.load %arg3[%c152, %c0_104] : memref<224x128xf32, #tpu.memory_space<vmem>>, vector<1x128xf32>
    %296 = vector.broadcast %295 : vector<1x128xf32> to vector<32x128xf32>
    %297 = arith.addf %294, %296 : vector<32x128xf32>
    %298 = arith.mulf %297, %297 : vector<32x128xf32>
    %299 = arith.mulf %297, %298 : vector<32x128xf32>
    %cst_105 = arith.constant 4.471500e-02 : f32
    %300 = vector.broadcast %cst_105 : f32 to vector<32x128xf32>
    %301 = arith.mulf %300, %299 : vector<32x128xf32>
    %302 = arith.addf %297, %301 : vector<32x128xf32>
    %cst_106 = arith.constant 0.797884583 : f32
    %303 = vector.broadcast %cst_106 : f32 to vector<32x128xf32>
    %304 = arith.mulf %303, %302 : vector<32x128xf32>
    %305 = math.tanh %304 : vector<32x128xf32>
    %cst_107 = arith.constant 1.000000e+00 : f32
    %306 = vector.broadcast %cst_107 : f32 to vector<32x128xf32>
    %307 = arith.addf %306, %305 : vector<32x128xf32>
    %cst_108 = arith.constant 5.000000e-01 : f32
    %308 = vector.broadcast %cst_108 : f32 to vector<32x128xf32>
    %309 = arith.mulf %308, %307 : vector<32x128xf32>
    %310 = arith.mulf %297, %309 : vector<32x128xf32>
    %311 = vector.extract_strided_slice %291 {offsets = [1, 0], sizes = [1, 128], strides = [1, 1]} : vector<14x128xf32> to vector<1x128xf32>
    %312 = vector.shape_cast %311 : vector<1x128xf32> to vector<1x128xf32>
    %313 = vector.broadcast %312 : vector<1x128xf32> to vector<16x128xf32>
    %314 = vector.extract_strided_slice %291 {offsets = [8, 0], sizes = [1, 128], strides = [1, 1]} : vector<14x128xf32> to vector<1x128xf32>
    %315 = vector.shape_cast %314 : vector<1x128xf32> to vector<1x128xf32>
    %316 = vector.broadcast %315 : vector<1x128xf32> to vector<16x128xf32>
    %317 = tpu.concatenate %313, %316 in 0 : vector<16x128xf32>, vector<16x128xf32> -> vector<32x128xf32>
    %318 = arith.mulf %310, %317 : vector<32x128xf32>
    %c0_109 = arith.constant 0 : index
    %c0_110 = arith.constant 0 : index
    %319 = vector.load %arg4[%c0_109, %c0_110] : memref<32x128xf32, #tpu.memory_space<vmem>>, vector<32x128xf32>
    tpu.vector_store %arg4[%c0_109, %c0_110], %318 {strides = array<i32>} : memref<32x128xf32, #tpu.memory_space<vmem>>, vector<32x128xf32>,
    return
  }
}

</mosaic_0001>

<llo_original>
// kernel: medsam_lite_forward.1
$region0: #{medsam_lite_forward.1}
  #allocation0 [shape = 'u32[]', space=smem, size = 0x4, offset = 0x4, fixed_abs, tag = 'smem constant byte address 0x4 - core index']
  #allocation1 [shape = 'u32[144,128]{1,0:T(1,128)}', space=vmem, size = 0x12000, scoped, tag = 'internal scratch']
  %s0 = inlined_call_operand.vmem [shape: f32[32,48], index: 0, kind: input, shape index: {}]
  %s1 = inlined_call_operand.vmem [shape: f32[14,32], index: 1, kind: input, shape index: {}]
  %s2 = inlined_call_operand.vmem [shape: bf16[560,128], index: 2, kind: input, shape index: {}]
  %s3 = inlined_call_operand.vmem [shape: f32[224,128], index: 3, kind: input, shape index: {}]
  %s4 = inlined_call_operand.vmem [shape: f32[32,128], index: 4, kind: output, shape index: {}]
  %s5 = sld [smem:[#allocation0]]
  $region26: #{medsam_lite_forward.1} parent=0
    _
  %s7 = ssub.s32 1, %s5
  %s8 = scalar_select 0, %s7, %s5
  // Predicated region
  $region2: #{medsam_lite_forward.1} parent=0 // pred_check
    _
  $region3: #{medsam_lite_forward.1} parent=0 // pred_check_branch
    %10 = sbr.rel (0) target = $region5
  $region4: #{medsam_lite_forward.1} parent=0 // pred_region
    _
  $region5: #{medsam_lite_forward.1} parent=0 // pred_fallthru
    _
  // Predicated region
  $region6: #{medsam_lite_forward.1} parent=0 // pred_check
    _
  $region7: #{medsam_lite_forward.1} parent=0 // pred_check_branch
    %12 = sbr.rel (0) target = $region9
  $region8: #{medsam_lite_forward.1} parent=0 // pred_region
    _
  $region9: #{medsam_lite_forward.1} parent=0 // pred_fallthru
    _
  // Predicated region
  $region10: #{medsam_lite_forward.1} parent=0 // pred_check
    _
  $region11: #{medsam_lite_forward.1} parent=0 // pred_check_branch
    %14 = sbr.rel (0) target = $region13
  $region12: #{medsam_lite_forward.1} parent=0 // pred_region
    _
  $region13: #{medsam_lite_forward.1} parent=0 // pred_fallthru
    _
  // Predicated region
  $region14: #{medsam_lite_forward.1} parent=0 // pred_check
    _
  $region15: #{medsam_lite_forward.1} parent=0 // pred_check_branch
    %16 = sbr.rel (0) target = $region17
  $region16: #{medsam_lite_forward.1} parent=0 // pred_region
    _
  $region17: #{medsam_lite_forward.1} parent=0 // pred_fallthru
    _
  %v18 = vld [vmem:[%s0] sm:$0xff]
  %v19 = vld [vmem:[%s0 + $0x8] sm:$0xff]
  %v20 = vld [vmem:[%s0 + $0x10] sm:$0xff]
  %v21 = vld [vmem:[%s0 + $0x18] sm:$0xff]
  %v22 = vpack.c.bf16 %v19, %v18
  %v23 = vpack.c.bf16 %v21, %v20
  %v24 = vld [vmem:[%s2] sm:$0xf]
  %v25 = vld [vmem:[%s2 + $0x4] sm:$0xf]
  %v26 = vld [vmem:[%s2 + $0x8] sm:$0xf]
  %v27 = vld [vmem:[%s2 + $0xc] sm:$0xf]
  %v28 = vld [vmem:[%s2 + $0x10] sm:$0xf]
  %v29 = vld [vmem:[%s2 + $0x14] sm:$0xf]
  %v30 = vld [vmem:[%s3] sm:$0x1]
  %v31 = vlaneseq
  %v32 = vshrl.u32 %v31, 7
  %v33 = vsub.s32 0, %v32
  %v34 = vrot.slane %v30, %v33
  %v41 = vunpack.c.l.b16 %v24
  %v42 = vunpack.c.l.b16 %v25
  %v43 = vunpack.c.l.b16 %v26
  %v44 = vunpack.c.l.b16 %v27
  %v45 = vunpack.c.l.b16 %v28
  %v46 = vunpack.c.l.b16 %v29
  %v47 = vpack.c.b16 %v42, %v41
  %v48 = vpack.c.b16 %v44, %v43
  %v49 = vpack.c.b16 %v46, %v45
  %vm53 = vcmask 392192
  %v55 = vsel %vm53, %v22, 0
  %v58 = vsel %vm53, %v23, 0
  %60 = vmatprep.subr.bf16.mxu0 0
  %61 = vmatpush1.bf16.msra.mxu0 %v47
  %62 = vmatprep.subr.bf16.mxu0 0
  %63 = vmatpush1.bf16.msra.mxu0 %v48
  %64 = vmatprep.subr.bf16.mxu0 0
  %65 = vmatpush1.bf16.msra.mxu0 %v49
  %66 = vmatprep.subr.bf16.mxu0 0
  %67 = vmatpush1.bf16.msra.mxu0 0
  %68 = vmatprep.subr.bf16.mxu0 0
  %69 = vmatpush1.bf16.msra.mxu0 0
  %70 = vmatprep.subr.bf16.mxu0 0
  %71 = vmatpush1.bf16.msra.mxu0 0
  %72 = vmatprep.subr.bf16.mxu0 0
  %73 = vmatpush1.bf16.msra.mxu0 0
  %74 = vmatprep.subr.bf16.mxu0 0
  %75 = vmatpush1.bf16.msra.mxu0 0
  %76 = vmatprep.subr.bf16.mxu0 0
  %77 = vmatpush1.bf16.msra.mxu0 0
  %78 = vmatprep.subr.bf16.mxu0 0
  %79 = vmatpush1.bf16.msra.mxu0 0
  %80 = vmatprep.subr.bf16.mxu0 0
  %81 = vmatpush1.bf16.msra.mxu0 0
  %82 = vmatprep.subr.bf16.mxu0 0
  %83 = vmatpush1.bf16.msra.mxu0 0
  %84 = vmatprep.subr.bf16.mxu0 0
  %85 = vmatpush1.bf16.msra.mxu0 0
  %86 = vmatprep.subr.bf16.mxu0 0
  %87 = vmatpush1.bf16.msra.mxu0 0
  %88 = vmatprep.subr.bf16.mxu0 0
  %89 = vmatpush1.bf16.msra.mxu0 0
  %90 = vmatprep.subr.bf16.mxu0 0
  %91 = vmatpush1.bf16.msra.mxu0 0
  %92 = vmatprep.mubr.bf16.mxu0 0
  %93 = vmatmul.mubr.bf16.gmra.mrb[0].mxu0 %v55
  %v94 = vpop.f32.mrb[0].mxu0
  %v95 = vadd.f32 %v34, %v94
  %v96 = vpop.f32.mrb[0].mxu0
  %v97 = vpop.f32.mrb[0].mxu0
  %v98 = vadd.f32 %v34, %v97
  %v99 = vpop.f32.mrb[0].mxu0
  %100 = vmatprep.mubr.bf16.mxu0 0
  %101 = vmatmul.mubr.bf16.gmra.mrb[0].mxu0 %v58
  %v102 = vpop.f32.mrb[0].mxu0
  %v103 = vadd.f32 %v34, %v102
  %v104 = vpop.f32.mrb[0].mxu0
  %v105 = vpop.f32.mrb[0].mxu0
  %v106 = vadd.f32 %v34, %v105
  %v107 = vpop.f32.mrb[0].mxu0
  %108 = vdwg.mxu0
  %v109 = vld [vmem:[%s3 + $0x8] sm:$0x3]
  %vm110 = vcmask 261120
  %v111 = vsel %vm110, %v95, 0.0
  %112 = vadd.xlane.f32.xlu0 %v111
  %v113 = vpop.xlane.xlu0 %112
  %v114 = vsel %vm110, %v98, 0.0
  %115 = vadd.xlane.f32.xlu0 %v114
  %v116 = vpop.xlane.xlu0 %115
  %v117 = vsel %vm110, %v103, 0.0
  %118 = vadd.xlane.f32.xlu0 %v117
  %v119 = vpop.xlane.xlu0 %118
  %v120 = vsel %vm110, %v106, 0.0
  %121 = vadd.xlane.f32.xlu0 %v120
  %v122 = vpop.xlane.xlu0 %121
  %v123 = vrcp.pop 32.0
  %v124 = vmul.f32 %v113, %v123
  %v125 = vmul.f32 %v116, %v123
  %v126 = vmul.f32 %v119, %v123
  %v127 = vmul.f32 %v122, %v123
  %v128 = vmul.f32 %v95, %v95
  %v129 = vmul.f32 %v98, %v98
  %v130 = vmul.f32 %v103, %v103
  %v131 = vmul.f32 %v106, %v106
  %v132 = vsel %vm110, %v128, 0.0
  %133 = vadd.xlane.f32.xlu0 %v132
  %v134 = vpop.xlane.xlu0 %133
  %v135 = vsel %vm110, %v129, 0.0
  %136 = vadd.xlane.f32.xlu0 %v135
  %v137 = vpop.xlane.xlu0 %136
  %v138 = vsel %vm110, %v130, 0.0
  %139 = vadd.xlane.f32.xlu0 %v138
  %v140 = vpop.xlane.xlu0 %139
  %v141 = vsel %vm110, %v131, 0.0
  %142 = vadd.xlane.f32.xlu0 %v141
  %v143 = vpop.xlane.xlu0 %142
  %v144 = vmul.f32 %v134, %v123
  %v145 = vmul.f32 %v137, %v123
  %v146 = vmul.f32 %v140, %v123
  %v147 = vmul.f32 %v143, %v123
  %v148 = vmul.f32 %v124, %v124
  %v149 = vmul.f32 %v125, %v125
  %v150 = vmul.f32 %v126, %v126
  %v151 = vmul.f32 %v127, %v127
  %v152 = vsub.f32 %v144, %v148
  %v153 = vsub.f32 %v145, %v149
  %v154 = vsub.f32 %v146, %v150
  %v155 = vsub.f32 %v147, %v151
  %v156 = vsub.f32 %v95, %v124
  %v157 = vsub.f32 %v98, %v125
  %v158 = vsub.f32 %v103, %v126
  %v159 = vsub.f32 %v106, %v127
  %v160 = vadd.f32 %v152, 1e-05
  %v161 = vadd.f32 %v153, 1e-05
  %v162 = vadd.f32 %v154, 1e-05
  %v163 = vadd.f32 %v155, 1e-05
  %v164 = vrsqrt.pop %v160
  %v165 = vrsqrt.pop %v161
  %v166 = vrsqrt.pop %v162
  %v167 = vrsqrt.pop %v163
  %v168 = vmul.f32 %v156, %v164
  %v169 = vmul.f32 %v157, %v165
  %v170 = vmul.f32 %v158, %v166
  %v171 = vmul.f32 %v159, %v167
  %v172 = vlaneseq
  %v173 = vshrl.u32 %v172, 7
  %v174 = vsub.s32 0, %v173
  %v175 = vrot.slane %v109, %v174
  %v176 = vmul.f32 %v168, %v175
  %v177 = vmul.f32 %v169, %v175
  %v178 = vmul.f32 %v170, %v175
  %v179 = vmul.f32 %v171, %v175
  %v180 = vlaneseq
  %v181 = vshrl.u32 %v180, 7
  %v182 = vsub.s32 1, %v181
  %v183 = vrot.slane %v109, %v182
  %v184 = vadd.f32 %v176, %v183
  %v185 = vadd.f32 %v177, %v183
  %v186 = vadd.f32 %v178, %v183
  %v187 = vadd.f32 %v179, %v183
  %v188 = vpack.c.bf16 %v185, %v184
  %v189 = vpack.c.bf16 %v187, %v186
  %v190 = vld [vmem:[%s2 + $0x18] sm:$0xf]
  %v191 = vld [vmem:[%s2 + $0x1c] sm:$0xf]
  %v192 = vld [vmem:[%s2 + $0x20] sm:$0xf]
  %v193 = vld [vmem:[%s2 + $0x24] sm:$0xf]
  %v194 = vld [vmem:[%s3 + $0x10] sm:$0x1]
  %v195 = vlaneseq
  %v196 = vshrl.u32 %v195, 7
  %v197 = vsub.s32 0, %v196
  %v198 = vrot.slane %v194, %v197
  %v203 = vunpack.c.l.b16 %v190
  %v204 = vunpack.c.l.b16 %v191
  %v205 = vunpack.c.l.b16 %v192
  %v206 = vunpack.c.l.b16 %v193
  %v207 = vpack.c.b16 %v204, %v203
  %v208 = vpack.c.b16 %v206, %v205
  %v212 = vsel %vm110, %v188, 0
  %v215 = vsel %vm110, %v189, 0
  %217 = vmatprep.subr.bf16.mxu0 0
  %218 = vmatpush1.bf16.msra.mxu0 %v207
  %219 = vmatprep.subr.bf16.mxu0 0
  %220 = vmatpush1.bf16.msra.mxu0 %v208
  %221 = vmatprep.subr.bf16.mxu0 0
  %222 = vmatpush1.bf16.msra.mxu0 0
  %223 = vmatprep.subr.bf16.mxu0 0
  %224 = vmatpush1.bf16.msra.mxu0 0
  %225 = vmatprep.subr.bf16.mxu0 0
  %226 = vmatpush1.bf16.msra.mxu0 0
  %227 = vmatprep.subr.bf16.mxu0 0
  %228 = vmatpush1.bf16.msra.mxu0 0
  %229 = vmatprep.subr.bf16.mxu0 0
  %230 = vmatpush1.bf16.msra.mxu0 0
  %231 = vmatprep.subr.bf16.mxu0 0
  %232 = vmatpush1.bf16.msra.mxu0 0
  %233 = vmatprep.subr.bf16.mxu0 0
  %234 = vmatpush1.bf16.msra.mxu0 0
  %235 = vmatprep.subr.bf16.mxu0 0
  %236 = vmatpush1.bf16.msra.mxu0 0
  %237 = vmatprep.subr.bf16.mxu0 0
  %238 = vmatpush1.bf16.msra.mxu0 0
  %239 = vmatprep.subr.bf16.mxu0 0
  %240 = vmatpush1.bf16.msra.mxu0 0
  %241 = vmatprep.subr.bf16.mxu0 0
  %242 = vmatpush1.bf16.msra.mxu0 0
  %243 = vmatprep.subr.bf16.mxu0 0
  %244 = vmatpush1.bf16.msra.mxu0 0
  %245 = vmatprep.subr.bf16.mxu0 0
  %246 = vmatpush1.bf16.msra.mxu0 0
  %247 = vmatprep.subr.bf16.mxu0 0
  %248 = vmatpush1.bf16.msra.mxu0 0
  %249 = vmatprep.mubr.bf16.mxu0 0
  %250 = vmatmul.mubr.bf16.gmra.mrb[0].mxu0 %v212
  %v251 = vpop.f32.mrb[0].mxu0
  %v252 = vadd.f32 %v198, %v251
  %v253 = vpop.f32.mrb[0].mxu0
  %v254 = vpop.f32.mrb[0].mxu0
  %v255 = vadd.f32 %v198, %v254
  %v256 = vpop.f32.mrb[0].mxu0
  %257 = vmatprep.mubr.bf16.mxu0 0
  %258 = vmatmul.mubr.bf16.gmra.mrb[0].mxu0 %v215
  %v259 = vpop.f32.mrb[0].mxu0
  %v260 = vadd.f32 %v198, %v259
  %v261 = vpop.f32.mrb[0].mxu0
  %v262 = vpop.f32.mrb[0].mxu0
  %v263 = vadd.f32 %v198, %v262
  %v264 = vpop.f32.mrb[0].mxu0
  %265 = vdwg.mxu0
  %v266 = vmul.f32 %v252, %v252
  %v267 = vmul.f32 %v255, %v255
  %v268 = vmul.f32 %v260, %v260
  %v269 = vmul.f32 %v263, %v263
  %v270 = vmul.f32 %v252, %v266
  %v271 = vmul.f32 %v255, %v267
  %v272 = vmul.f32 %v260, %v268
  %v273 = vmul.f32 %v263, %v269
  %v274 = vmul.f32 %v270, 0.044715
  %v275 = vmul.f32 %v271, 0.044715
  %v276 = vmul.f32 %v272, 0.044715
  %v277 = vmul.f32 %v273, 0.044715
  %v278 = vadd.f32 %v252, %v274
  %v279 = vadd.f32 %v255, %v275
  %v280 = vadd.f32 %v260, %v276
  %v281 = vadd.f32 %v263, %v277
  %v282 = vmul.f32 %v278, 0.7978846
  %v283 = vmul.f32 %v279, 0.7978846
  %v284 = vmul.f32 %v280, 0.7978846
  %v285 = vmul.f32 %v281, 0.7978846
  %v286 = vtanh.pop %v282
  %v287 = vtanh.pop %v283
  %v288 = vtanh.pop %v284
  %v289 = vtanh.pop %v285
  %v290 = vadd.f32 %v286, 1.0
  %v291 = vadd.f32 %v287, 1.0
  %v292 = vadd.f32 %v288, 1.0
  %v293 = vadd.f32 %v289, 1.0
  %v294 = vmul.f32 %v290, 0.5
  %v295 = vmul.f32 %v291, 0.5
  %v296 = vmul.f32 %v292, 0.5
  %v297 = vmul.f32 %v293, 0.5
  %v298 = vmul.f32 %v252, %v294
  %v299 = vmul.f32 %v255, %v295
  %v300 = vmul.f32 %v260, %v296
  %v301 = vmul.f32 %v263, %v297
  %v302 = vpack.c.bf16 %v299, %v298
  %v303 = vpack.c.bf16 %v301, %v300
  %v304 = vld [vmem:[%s2 + $0x28] sm:$0xf]
  %v305 = vld [vmem:[%s2 + $0x2c] sm:$0xf]
  %v306 = vld [vmem:[%s2 + $0x30] sm:$0xf]
  %v307 = vld [vmem:[%s2 + $0x34] sm:$0xf]
  %v308 = vld [vmem:[%s2 + $0x38] sm:$0xf]
  %v309 = vld [vmem:[%s2 + $0x3c] sm:$0xf]
  %v310 = vld [vmem:[%s2 + $0x40] sm:$0xf]
  %v311 = vld [vmem:[%s2 + $0x44] sm:$0xf]
  %v312 = vld [vmem:[%s3 + $0x18] sm:$0x1]
  %v313 = vlaneseq
  %v314 = vshrl.u32 %v313, 7
  %v315 = vsub.s32 0, %v314
  %v316 = vrot.slane %v312, %v315
  %v325 = vunpack.c.l.b16 %v304
  %v326 = vunpack.c.l.b16 %v305
  %v327 = vunpack.c.l.b16 %v306
  %v328 = vunpack.c.l.b16 %v307
  %v329 = vunpack.c.l.b16 %v308
  %v330 = vunpack.c.l.b16 %v309
  %v331 = vunpack.c.l.b16 %v310
  %v332 = vunpack.c.l.b16 %v311
  %v333 = vpack.c.b16 %v326, %v325
  %v334 = vpack.c.b16 %v328, %v327
  %v335 = vpack.c.b16 %v330, %v329
  %v336 = vpack.c.b16 %v332, %v331
  %vm341 = vcmask 523264
  %v343 = vsel %vm341, %v302, 0
  %v346 = vsel %vm341, %v303, 0
  %348 = vmatprep.subr.bf16.mxu0 0
  %349 = vmatpush1.bf16.msra.mxu0 %v333
  %350 = vmatprep.subr.bf16.mxu0 0
  %351 = vmatpush1.bf16.msra.mxu0 %v334
  %352 = vmatprep.subr.bf16.mxu0 0
  %353 = vmatpush1.bf16.msra.mxu0 %v335
  %354 = vmatprep.subr.bf16.mxu0 0
  %355 = vmatpush1.bf16.msra.mxu0 %v336
  %356 = vmatprep.subr.bf16.mxu0 0
  %357 = vmatpush1.bf16.msra.mxu0 0
  %358 = vmatprep.subr.bf16.mxu0 0
  %359 = vmatpush1.bf16.msra.mxu0 0
  %360 = vmatprep.subr.bf16.mxu0 0
  %361 = vmatpush1.bf16.msra.mxu0 0
  %362 = vmatprep.subr.bf16.mxu0 0
  %363 = vmatpush1.bf16.msra.mxu0 0
  %364 = vmatprep.subr.bf16.mxu0 0
  %365 = vmatpush1.bf16.msra.mxu0 0
  %366 = vmatprep.subr.bf16.mxu0 0
  %367 = vmatpush1.bf16.msra.mxu0 0
  %368 = vmatprep.subr.bf16.mxu0 0
  %369 = vmatpush1.bf16.msra.mxu0 0
  %370 = vmatprep.subr.bf16.mxu0 0
  %371 = vmatpush1.bf16.msra.mxu0 0
  %372 = vmatprep.subr.bf16.mxu0 0
  %373 = vmatpush1.bf16.msra.mxu0 0
  %374 = vmatprep.subr.bf16.mxu0 0
  %375 = vmatpush1.bf16.msra.mxu0 0
  %376 = vmatprep.subr.bf16.mxu0 0
  %377 = vmatpush1.bf16.msra.mxu0 0
  %378 = vmatprep.subr.bf16.mxu0 0
  %379 = vmatpush1.bf16.msra.mxu0 0
  %380 = vmatprep.mubr.bf16.mxu0 0
  %381 = vmatmul.mubr.bf16.gmra.mrb[0].mxu0 %v343
  %v382 = vpop.f32.mrb[0].mxu0
  %v383 = vadd.f32 %v316, %v382
  %v384 = vpop.f32.mrb[0].mxu0
  %v385 = vpop.f32.mrb[0].mxu0
  %v386 = vadd.f32 %v316, %v385
  %v387 = vpop.f32.mrb[0].mxu0
  %388 = vmatprep.mubr.bf16.mxu0 0
  %389 = vmatmul.mubr.bf16.gmra.mrb[0].mxu0 %v346
  %v390 = vpop.f32.mrb[0].mxu0
  %v391 = vadd.f32 %v316, %v390
  %v392 = vpop.f32.mrb[0].mxu0
  %v393 = vpop.f32.mrb[0].mxu0
  %v394 = vadd.f32 %v316, %v393
  %v395 = vpop.f32.mrb[0].mxu0
  %396 = vdwg.mxu0
  %v397 = vadd.f32 %v95, %v383
  %v398 = vadd.f32 %v98, %v386
  %v399 = vadd.f32 %v103, %v391
  %v400 = vadd.f32 %v106, %v394
  %v401 = vld [vmem:[%s3 + $0x20] sm:$0x3]
  %v402 = vsel %vm110, %v397, 0.0
  %403 = vadd.xlane.f32.xlu0 %v402
  %v404 = vpop.xlane.xlu0 %403
  %v405 = vsel %vm110, %v398, 0.0
  %406 = vadd.xlane.f32.xlu0 %v405
  %v407 = vpop.xlane.xlu0 %406
  %v408 = vsel %vm110, %v399, 0.0
  %409 = vadd.xlane.f32.xlu0 %v408
  %v410 = vpop.xlane.xlu0 %409
  %v411 = vsel %vm110, %v400, 0.0
  %412 = vadd.xlane.f32.xlu0 %v411
  %v413 = vpop.xlane.xlu0 %412
  %v414 = vmul.f32 %v404, %v123
  %v415 = vmul.f32 %v407, %v123
  %v416 = vmul.f32 %v410, %v123
  %v417 = vmul.f32 %v413, %v123
  %v418 = vmul.f32 %v397, %v397
  %v419 = vmul.f32 %v398, %v398
  %v420 = vmul.f32 %v399, %v399
  %v421 = vmul.f32 %v400, %v400
  %v422 = vsel %vm110, %v418, 0.0
  %423 = vadd.xlane.f32.xlu0 %v422
  %v424 = vpop.xlane.xlu0 %423
  %v425 = vsel %vm110, %v419, 0.0
  %426 = vadd.xlane.f32.xlu0 %v425
  %v427 = vpop.xlane.xlu0 %426
  %v428 = vsel %vm110, %v420, 0.0
  %429 = vadd.xlane.f32.xlu0 %v428
  %v430 = vpop.xlane.xlu0 %429
  %v431 = vsel %vm110, %v421, 0.0
  %432 = vadd.xlane.f32.xlu0 %v431
  %v433 = vpop.xlane.xlu0 %432
  %v434 = vmul.f32 %v424, %v123
  %v435 = vmul.f32 %v427, %v123
  %v436 = vmul.f32 %v430, %v123
  %v437 = vmul.f32 %v433, %v123
  %v438 = vmul.f32 %v414, %v414
  %v439 = vmul.f32 %v415, %v415
  %v440 = vmul.f32 %v416, %v416
  %v441 = vmul.f32 %v417, %v417
  %v442 = vsub.f32 %v434, %v438
  %v443 = vsub.f32 %v435, %v439
  %v444 = vsub.f32 %v436, %v440
  %v445 = vsub.f32 %v437, %v441
  %v446 = vsub.f32 %v397, %v414
  %v447 = vsub.f32 %v398, %v415
  %v448 = vsub.f32 %v399, %v416
  %v449 = vsub.f32 %v400, %v417
  %v450 = vadd.f32 %v442, 1e-05
  %v451 = vadd.f32 %v443, 1e-05
  %v452 = vadd.f32 %v444, 1e-05
  %v453 = vadd.f32 %v445, 1e-05
  %v454 = vrsqrt.pop %v450
  %v455 = vrsqrt.pop %v451
  %v456 = vrsqrt.pop %v452
  %v457 = vrsqrt.pop %v453
  %v458 = vmul.f32 %v446, %v454
  %v459 = vmul.f32 %v447, %v455
  %v460 = vmul.f32 %v448, %v456
  %v461 = vmul.f32 %v449, %v457
  %v462 = vlaneseq
  %v463 = vshrl.u32 %v462, 7
  %v464 = vsub.s32 0, %v463
  %v465 = vrot.slane %v401, %v464
  %v466 = vmul.f32 %v458, %v465
  %v467 = vmul.f32 %v459, %v465
  %v468 = vmul.f32 %v460, %v465
  %v469 = vmul.f32 %v461, %v465
  %v470 = vlaneseq
  %v471 = vshrl.u32 %v470, 7
  %v472 = vsub.s32 1, %v471
  %v473 = vrot.slane %v401, %v472
  %v474 = vadd.f32 %v466, %v473
  %v475 = vadd.f32 %v467, %v473
  %v476 = vadd.f32 %v468, %v473
  %v477 = vadd.f32 %v469, %v473
  %v478 = vld [vmem:[%s3 + $0x28] sm:$0x1]
  %v479 = vlaneseq
  %v480 = vshrl.u32 %v479, 7
  %v481 = vsub.s32 0, %v480
  %v482 = vrot.slane %v478, %v481
  %v483 = vadd.f32 %v474, %v482
  %v484 = vadd.f32 %v475, %v482
  %v485 = vadd.f32 %v476, %v482
  %v486 = vadd.f32 %v477, %v482
  %v487 = vld [vmem:[%s1] sm:$0xff]
  %v488 = vld [vmem:[%s1 + $0x8] sm:$0x3f]
  %v489 = vpack.c.bf16 %v488, %v487
  %v490 = vld [vmem:[%s2 + $0x48] sm:$0xf]
  %v491 = vld [vmem:[%s2 + $0x4c] sm:$0xf]
  %v492 = vld [vmem:[%s2 + $0x50] sm:$0xf]
  %v493 = vld [vmem:[%s2 + $0x54] sm:$0xf]
  %v494 = vld [vmem:[%s3 + $0x30] sm:$0x1]
  %v495 = vlaneseq
  %v496 = vshrl.u32 %v495, 7
  %v497 = vsub.s32 0, %v496
  %v498 = vrot.slane %v494, %v497
  %v503 = vunpack.c.l.b16 %v490
  %v504 = vunpack.c.l.b16 %v491
  %v505 = vunpack.c.l.b16 %v492
  %v506 = vunpack.c.l.b16 %v493
  %v507 = vpack.c.b16 %v504, %v503
  %v508 = vpack.c.b16 %v506, %v505
  %v512 = vsel %vm110, %v489, 0
  %514 = vmatprep.subr.bf16.mxu0 0
  %515 = vmatpush1.bf16.msra.mxu0 %v507
  %516 = vmatprep.subr.bf16.mxu0 0
  %517 = vmatpush1.bf16.msra.mxu0 %v508
  %518 = vmatprep.subr.bf16.mxu0 0
  %519 = vmatpush1.bf16.msra.mxu0 0
  %520 = vmatprep.subr.bf16.mxu0 0
  %521 = vmatpush1.bf16.msra.mxu0 0
  %522 = vmatprep.subr.bf16.mxu0 0
  %523 = vmatpush1.bf16.msra.mxu0 0
  %524 = vmatprep.subr.bf16.mxu0 0
  %525 = vmatpush1.bf16.msra.mxu0 0
  %526 = vmatprep.subr.bf16.mxu0 0
  %527 = vmatpush1.bf16.msra.mxu0 0
  %528 = vmatprep.subr.bf16.mxu0 0
  %529 = vmatpush1.bf16.msra.mxu0 0
  %530 = vmatprep.subr.bf16.mxu0 0
  %531 = vmatpush1.bf16.msra.mxu0 0
  %532 = vmatprep.subr.bf16.mxu0 0
  %533 = vmatpush1.bf16.msra.mxu0 0
  %534 = vmatprep.subr.bf16.mxu0 0
  %535 = vmatpush1.bf16.msra.mxu0 0
  %536 = vmatprep.subr.bf16.mxu0 0
  %537 = vmatpush1.bf16.msra.mxu0 0
  %538 = vmatprep.subr.bf16.mxu0 0
  %539 = vmatpush1.bf16.msra.mxu0 0
  %540 = vmatprep.subr.bf16.mxu0 0
  %541 = vmatpush1.bf16.msra.mxu0 0
  %542 = vmatprep.subr.bf16.mxu0 0
  %543 = vmatpush1.bf16.msra.mxu0 0
  %544 = vmatprep.subr.bf16.mxu0 0
  %545 = vmatpush1.bf16.msra.mxu0 0
  %546 = vmatprep.mubr.bf16.mxu0 0
  %547 = vmatmul.mubr.bf16.gmra.mrb[0].mxu0 %v512
  %v548 = vpop.f32.mrb[0].mxu0
  %v549 = vadd.f32 %v498, %v548
  %v550 = vpop.f32.mrb[0].mxu0
  %v551 = vpop.f32.mrb[0].mxu0
  %v552 = vadd.f32 %v498, %v551
  %v553 = vpop.f32.mrb[0].mxu0
  %554 = vdwg.mxu0
  %v555 = vpack.c.bf16 %v552, %v549
  %557 = vrot.lane.b32.xlu0 %v555, 96
  %v558 = vpop.permute.xlu0 %557
  %v560 = vsel %vm110, %v555, 0
  %v563 = vsel %vm110, %v558, 0
  %565 = vmatprep.subr.bf16.mxu0 0
  %566 = vmatpush1.bf16.xpose.msra.mxu0 %v563
  %567 = vmatprep.subr.bf16.mxu0 0
  %568 = vmatpush1.bf16.xpose.msra.mxu0 0
  %569 = vmatprep.subr.bf16.mxu0 0
  %570 = vmatpush1.bf16.xpose.msra.mxu0 0
  %571 = vmatprep.subr.bf16.mxu0 0
  %572 = vmatpush1.bf16.xpose.msra.mxu0 0
  %573 = vmatprep.subr.bf16.mxu0 0
  %574 = vmatpush1.bf16.xpose.msra.mxu0 0
  %575 = vmatprep.subr.bf16.mxu0 0
  %576 = vmatpush1.bf16.xpose.msra.mxu0 0
  %577 = vmatprep.subr.bf16.mxu0 0
  %578 = vmatpush1.bf16.xpose.msra.mxu0 0
  %579 = vmatprep.subr.bf16.mxu0 0
  %580 = vmatpush1.bf16.xpose.msra.mxu0 0
  %581 = vmatprep.subr.bf16.mxu0 0
  %582 = vmatpush1.bf16.xpose.msra.mxu0 0
  %583 = vmatprep.subr.bf16.mxu0 0
  %584 = vmatpush1.bf16.xpose.msra.mxu0 0
  %585 = vmatprep.subr.bf16.mxu0 0
  %586 = vmatpush1.bf16.xpose.msra.mxu0 0
  %587 = vmatprep.subr.bf16.mxu0 0
  %588 = vmatpush1.bf16.xpose.msra.mxu0 0
  %589 = vmatprep.subr.bf16.mxu0 0
  %590 = vmatpush1.bf16.xpose.msra.mxu0 0
  %591 = vmatprep.subr.bf16.mxu0 0
  %592 = vmatpush1.bf16.xpose.msra.mxu0 0
  %593 = vmatprep.subr.bf16.mxu0 0
  %594 = vmatpush1.bf16.xpose.msra.mxu0 0
  %595 = vmatprep.subr.bf16.mxu0 0
  %596 = vmatpush1.bf16.xpose.msra.mxu0 0
  %597 = vmatprep.mubr.bf16.mxu0 0
  %598 = vmatmul.mubr.bf16.gmra.mrb[0].mxu0 %v560
  %v599 = vpop.f32.mrb[0].mxu0
  %v600 = vadd.f32 0.0, %v599
  %v601 = vpop.f32.mrb[0].mxu0
  %v602 = vpop.f32.mrb[0].mxu0
  %v603 = vadd.f32 0.0, %v602
  %v604 = vpop.f32.mrb[0].mxu0
  %605 = vdwg.mxu0
  %v606 = vmul.f32 %v600, 0.17677669
  %v607 = vmul.f32 %v603, 0.17677669
  %v608 = vld [vmem:[%s3 + $0xc0] sm:$0xff]
  %v609 = vld [vmem:[%s3 + $0xc8] sm:$0x3f]
  %v610 = vadd.f32 %v606, %v608
  %v611 = vadd.f32 %v607, %v609
  %vm612 = vcmask 113664
  %v613 = vsel %vm612, %v610, -inf
  %614 = vmax.xlane.f32.xlu0 %v613
  %v615 = vpop.xlane.xlu0 %614
  %vm616 = vcmask 111616
  %v617 = vsel %vm616, %v611, -inf
  %618 = vmax.xlane.f32.xlu0 %v617
  %v619 = vpop.xlane.xlu0 %618
  %v620 = vsub.f32 %v610, %v615
  %v621 = vsub.f32 %v611, %v619
  %v622 = vmul.f32 %v620, 1.442695
  %v623 = vpow.pop %v622
  %v624 = vmul.f32 %v621, 1.442695
  %v625 = vpow.pop %v624
  %v626 = vsel %vm612, %v623, 0.0
  %627 = vadd.xlane.f32.xlu0 %v626
  %v628 = vpop.xlane.xlu0 %627
  %v629 = vsel %vm616, %v625, 0.0
  %630 = vadd.xlane.f32.xlu0 %v629
  %v631 = vpop.xlane.xlu0 %630
  %v632 = vrcp.pop %v628
  %v633 = vrcp.pop %v631
  %v634 = vmul.f32 %v623, %v632
  %v635 = vmul.f32 %v625, %v633
  %v636 = vpack.c.bf16 %v635, %v634
  %637 = vrot.lane.b32.xlu0 %v555, 64
  %v638 = vpop.permute.xlu0 %637
  %v640 = vsel %vm612, %v636, 0
  %vm642 = vcmask 1046528
  %v644 = vsel %vm642, %v638, 0
  %646 = vmatprep.subr.bf16.mxu0 0
  %647 = vmatpush1.bf16.msra.mxu0 %v644
  %648 = vmatprep.subr.bf16.mxu0 0
  %649 = vmatpush1.bf16.msra.mxu0 0
  %650 = vmatprep.subr.bf16.mxu0 0
  %651 = vmatpush1.bf16.msra.mxu0 0
  %652 = vmatprep.subr.bf16.mxu0 0
  %653 = vmatpush1.bf16.msra.mxu0 0
  %654 = vmatprep.subr.bf16.mxu0 0
  %655 = vmatpush1.bf16.msra.mxu0 0
  %656 = vmatprep.subr.bf16.mxu0 0
  %657 = vmatpush1.bf16.msra.mxu0 0
  %658 = vmatprep.subr.bf16.mxu0 0
  %659 = vmatpush1.bf16.msra.mxu0 0
  %660 = vmatprep.subr.bf16.mxu0 0
  %661 = vmatpush1.bf16.msra.mxu0 0
  %662 = vmatprep.subr.bf16.mxu0 0
  %663 = vmatpush1.bf16.msra.mxu0 0
  %664 = vmatprep.subr.bf16.mxu0 0
  %665 = vmatpush1.bf16.msra.mxu0 0
  %666 = vmatprep.subr.bf16.mxu0 0
  %667 = vmatpush1.bf16.msra.mxu0 0
  %668 = vmatprep.subr.bf16.mxu0 0
  %669 = vmatpush1.bf16.msra.mxu0 0
  %670 = vmatprep.subr.bf16.mxu0 0
  %671 = vmatpush1.bf16.msra.mxu0 0
  %672 = vmatprep.subr.bf16.mxu0 0
  %673 = vmatpush1.bf16.msra.mxu0 0
  %674 = vmatprep.subr.bf16.mxu0 0
  %675 = vmatpush1.bf16.msra.mxu0 0
  %676 = vmatprep.subr.bf16.mxu0 0
  %677 = vmatpush1.bf16.msra.mxu0 0
  %678 = vmatprep.mubr.bf16.mxu0 0
  %679 = vmatmul.mubr.bf16.gmra.mrb[0].mxu0 %v640
  %v680 = vpop.f32.mrb[0].mxu0
  %v681 = vadd.f32 0.0, %v680
  %v682 = vpop.f32.mrb[0].mxu0
  %v683 = vpop.f32.mrb[0].mxu0
  %v684 = vadd.f32 0.0, %v683
  %v685 = vpop.f32.mrb[0].mxu0
  %686 = vdwg.mxu0
  %v687 = vpack.c.bf16 %v684, %v681
  %v688 = vld [vmem:[%s2 + $0x58] sm:$0xf]
  %v689 = vld [vmem:[%s2 + $0x5c] sm:$0xf]
  %v690 = vld [vmem:[%s2 + $0x60] sm:$0xf]
  %v691 = vld [vmem:[%s2 + $0x64] sm:$0xf]
  %v692 = vld [vmem:[%s3 + $0x38] sm:$0x1]
  %v693 = vlaneseq
  %v694 = vshrl.u32 %v693, 7
  %v695 = vsub.s32 0, %v694
  %v696 = vrot.slane %v692, %v695
  %v701 = vunpack.c.l.b16 %v688
  %v702 = vunpack.c.l.b16 %v689
  %v703 = vunpack.c.l.b16 %v690
  %v704 = vunpack.c.l.b16 %v691
  %v705 = vpack.c.b16 %v702, %v701
  %v706 = vpack.c.b16 %v704, %v703
  %v710 = vsel %vm110, %v687, 0
  %712 = vmatprep.subr.bf16.mxu0 0
  %713 = vmatpush1.bf16.msra.mxu0 %v705
  %714 = vmatprep.subr.bf16.mxu0 0
  %715 = vmatpush1.bf16.msra.mxu0 %v706
  %716 = vmatprep.subr.bf16.mxu0 0
  %717 = vmatpush1.bf16.msra.mxu0 0
  %718 = vmatprep.subr.bf16.mxu0 0
  %719 = vmatpush1.bf16.msra.mxu0 0
  %720 = vmatprep.subr.bf16.mxu0 0
  %721 = vmatpush1.bf16.msra.mxu0 0
  %722 = vmatprep.subr.bf16.mxu0 0
  %723 = vmatpush1.bf16.msra.mxu0 0
  %724 = vmatprep.subr.bf16.mxu0 0
  %725 = vmatpush1.bf16.msra.mxu0 0
  %726 = vmatprep.subr.bf16.mxu0 0
  %727 = vmatpush1.bf16.msra.mxu0 0
  %728 = vmatprep.subr.bf16.mxu0 0
  %729 = vmatpush1.bf16.msra.mxu0 0
  %730 = vmatprep.subr.bf16.mxu0 0
  %731 = vmatpush1.bf16.msra.mxu0 0
  %732 = vmatprep.subr.bf16.mxu0 0
  %733 = vmatpush1.bf16.msra.mxu0 0
  %734 = vmatprep.subr.bf16.mxu0 0
  %735 = vmatpush1.bf16.msra.mxu0 0
  %736 = vmatprep.subr.bf16.mxu0 0
  %737 = vmatpush1.bf16.msra.mxu0 0
  %738 = vmatprep.subr.bf16.mxu0 0
  %739 = vmatpush1.bf16.msra.mxu0 0
  %740 = vmatprep.subr.bf16.mxu0 0
  %741 = vmatpush1.bf16.msra.mxu0 0
  %742 = vmatprep.subr.bf16.mxu0 0
  %743 = vmatpush1.bf16.msra.mxu0 0
  %744 = vmatprep.mubr.bf16.mxu0 0
  %745 = vmatmul.mubr.bf16.gmra.mrb[0].mxu0 %v710
  %v746 = vpop.f32.mrb[0].mxu0
  %v747 = vadd.f32 %v696, %v746
  %v748 = vpop.f32.mrb[0].mxu0
  %v749 = vpop.f32.mrb[0].mxu0
  %v750 = vadd.f32 %v696, %v749
  %v751 = vpop.f32.mrb[0].mxu0
  %752 = vdwg.mxu0
  %v753 = vadd.f32 %v487, %v747
  %v754 = vadd.f32 %v488, %v750
  %v755 = vld [vmem:[%s3 + $0x40] sm:$0x3]
  %v756 = vsel %vm110, %v753, 0.0
  %757 = vadd.xlane.f32.xlu0 %v756
  %v758 = vpop.xlane.xlu0 %757
  %vm759 = vcmask 259072
  %v760 = vsel %vm759, %v754, 0.0
  %761 = vadd.xlane.f32.xlu0 %v760
  %v762 = vpop.xlane.xlu0 %761
  %v763 = vmul.f32 %v758, %v123
  %v764 = vmul.f32 %v762, %v123
  %v765 = vmul.f32 %v753, %v753
  %v766 = vmul.f32 %v754, %v754
  %v767 = vsel %vm110, %v765, 0.0
  %768 = vadd.xlane.f32.xlu0 %v767
  %v769 = vpop.xlane.xlu0 %768
  %v770 = vsel %vm759, %v766, 0.0
  %771 = vadd.xlane.f32.xlu0 %v770
  %v772 = vpop.xlane.xlu0 %771
  %v773 = vmul.f32 %v769, %v123
  %v774 = vmul.f32 %v772, %v123
  %v775 = vmul.f32 %v763, %v763
  %v776 = vmul.f32 %v764, %v764
  %v777 = vsub.f32 %v773, %v775
  %v778 = vsub.f32 %v774, %v776
  %v779 = vsub.f32 %v753, %v763
  %v780 = vsub.f32 %v754, %v764
  %v781 = vadd.f32 %v777, 1e-05
  %v782 = vadd.f32 %v778, 1e-05
  %v783 = vrsqrt.pop %v781
  %v784 = vrsqrt.pop %v782
  %v785 = vmul.f32 %v779, %v783
  %v786 = vmul.f32 %v780, %v784
  %v787 = vlaneseq
  %v788 = vshrl.u32 %v787, 7
  %v789 = vsub.s32 0, %v788
  %v790 = vrot.slane %v755, %v789
  %v791 = vmul.f32 %v785, %v790
  %v792 = vmul.f32 %v786, %v790
  %v793 = vlaneseq
  %v794 = vshrl.u32 %v793, 7
  %v795 = vsub.s32 1, %v794
  %v796 = vrot.slane %v755, %v795
  %v797 = vadd.f32 %v791, %v796
  %v798 = vadd.f32 %v792, %v796
  %v799 = vpack.c.bf16 %v484, %v483
  %v800 = vpack.c.bf16 %v486, %v485
  %v801 = vld [vmem:[%s2 + $0x78] sm:$0xf]
  %v802 = vld [vmem:[%s2 + $0x7c] sm:$0xf]
  %v803 = vld [vmem:[%s2 + $0x80] sm:$0xf]
  %v804 = vld [vmem:[%s2 + $0x84] sm:$0xf]
  %v805 = vld [vmem:[%s3 + $0x50] sm:$0x1]
  %v806 = vlaneseq
  %v807 = vshrl.u32 %v806, 7
  %v808 = vsub.s32 0, %v807
  %v809 = vrot.slane %v805, %v808
  %v814 = vunpack.c.l.b16 %v801
  %v815 = vunpack.c.l.b16 %v802
  %v816 = vunpack.c.l.b16 %v803
  %v817 = vunpack.c.l.b16 %v804
  %v818 = vpack.c.b16 %v815, %v814
  %v819 = vpack.c.b16 %v817, %v816
  %v823 = vsel %vm110, %v799, 0
  %v826 = vsel %vm110, %v800, 0
  %828 = vmatprep.subr.bf16.mxu0 0
  %829 = vmatpush1.bf16.msra.mxu0 %v818
  %830 = vmatprep.subr.bf16.mxu0 0
  %831 = vmatpush1.bf16.msra.mxu0 %v819
  %832 = vmatprep.subr.bf16.mxu0 0
  %833 = vmatpush1.bf16.msra.mxu0 0
  %834 = vmatprep.subr.bf16.mxu0 0
  %835 = vmatpush1.bf16.msra.mxu0 0
  %836 = vmatprep.subr.bf16.mxu0 0
  %837 = vmatpush1.bf16.msra.mxu0 0
  %838 = vmatprep.subr.bf16.mxu0 0
  %839 = vmatpush1.bf16.msra.mxu0 0
  %840 = vmatprep.subr.bf16.mxu0 0
  %841 = vmatpush1.bf16.msra.mxu0 0
  %842 = vmatprep.subr.bf16.mxu0 0
  %843 = vmatpush1.bf16.msra.mxu0 0
  %844 = vmatprep.subr.bf16.mxu0 0
  %845 = vmatpush1.bf16.msra.mxu0 0
  %846 = vmatprep.subr.bf16.mxu0 0
  %847 = vmatpush1.bf16.msra.mxu0 0
  %848 = vmatprep.subr.bf16.mxu0 0
  %849 = vmatpush1.bf16.msra.mxu0 0
  %850 = vmatprep.subr.bf16.mxu0 0
  %851 = vmatpush1.bf16.msra.mxu0 0
  %852 = vmatprep.subr.bf16.mxu0 0
  %853 = vmatpush1.bf16.msra.mxu0 0
  %854 = vmatprep.subr.bf16.mxu0 0
  %855 = vmatpush1.bf16.msra.mxu0 0
  %856 = vmatprep.subr.bf16.mxu0 0
  %857 = vmatpush1.bf16.msra.mxu0 0
  %858 = vmatprep.subr.bf16.mxu0 0
  %859 = vmatpush1.bf16.msra.mxu0 0
  %860 = vmatprep.mubr.bf16.mxu0 0
  %861 = vmatmul.mubr.bf16.gmra.mrb[0].mxu0 %v823
  %v862 = vpop.f32.mrb[0].mxu0
  %v863 = vadd.f32 %v809, %v862
  %v864 = vpop.f32.mrb[0].mxu0
  %v865 = vpop.f32.mrb[0].mxu0
  %v866 = vadd.f32 %v809, %v865
  %v867 = vpop.f32.mrb[0].mxu0
  %868 = vmatprep.mubr.bf16.mxu0 0
  %869 = vmatmul.mubr.bf16.gmra.mrb[0].mxu0 %v826
  %v870 = vpop.f32.mrb[0].mxu0
  %v871 = vadd.f32 %v809, %v870
  %v872 = vpop.f32.mrb[0].mxu0
  %v873 = vpop.f32.mrb[0].mxu0
  %v874 = vadd.f32 %v809, %v873
  %v875 = vpop.f32.mrb[0].mxu0
  %876 = vdwg.mxu0
  %v877 = vld [vmem:[%s3 + $0xa0] sm:$0xff]
  %v878 = vld [vmem:[%s3 + $0xa8] sm:$0xff]
  %v879 = vld [vmem:[%s3 + $0xb0] sm:$0xff]
  %v880 = vld [vmem:[%s3 + $0xb8] sm:$0xff]
  %v881 = vadd.f32 %v863, %v877
  %v882 = vadd.f32 %v866, %v878
  %v883 = vadd.f32 %v871, %v879
  %v884 = vadd.f32 %v874, %v880
  %v885 = vmul.f32 %v863, %v863
  %v886 = vmul.f32 %v866, %v866
  %v887 = vmul.f32 %v871, %v871
  %v888 = vmul.f32 %v874, %v874
  %v889 = vmul.f32 %v863, %v885
  %v890 = vmul.f32 %v866, %v886
  %v891 = vmul.f32 %v871, %v887
  %v892 = vmul.f32 %v874, %v888
  %v893 = vmul.f32 %v889, 0.044715
  %v894 = vmul.f32 %v890, 0.044715
  %v895 = vmul.f32 %v891, 0.044715
  %v896 = vmul.f32 %v892, 0.044715
  %v897 = vadd.f32 %v863, %v893
  %v898 = vadd.f32 %v866, %v894
  %v899 = vadd.f32 %v871, %v895
  %v900 = vadd.f32 %v874, %v896
  %v901 = vmul.f32 %v897, 0.7978846
  %v902 = vmul.f32 %v898, 0.7978846
  %v903 = vmul.f32 %v899, 0.7978846
  %v904 = vmul.f32 %v900, 0.7978846
  %v905 = vtanh.pop %v901
  %v906 = vtanh.pop %v902
  %v907 = vtanh.pop %v903
  %v908 = vtanh.pop %v904
  %v909 = vadd.f32 %v905, 1.0
  %v910 = vadd.f32 %v906, 1.0
  %v911 = vadd.f32 %v907, 1.0
  %v912 = vadd.f32 %v908, 1.0
  %v913 = vmul.f32 %v909, 0.5
  %v914 = vmul.f32 %v910, 0.5
  %v915 = vmul.f32 %v911, 0.5
  %v916 = vmul.f32 %v912, 0.5
  %v917 = vmul.f32 %v863, %v913
  %v918 = vmul.f32 %v866, %v914
  %v919 = vmul.f32 %v871, %v915
  %v920 = vmul.f32 %v874, %v916
  %v921 = vpack.c.bf16 %v798, %v797
  %v922 = vld [vmem:[%s2 + $0x68] sm:$0xf]
  %v923 = vld [vmem:[%s2 + $0x6c] sm:$0xf]
  %v924 = vld [vmem:[%s2 + $0x70] sm:$0xf]
  %v925 = vld [vmem:[%s2 + $0x74] sm:$0xf]
  %v926 = vld [vmem:[%s3 + $0x48] sm:$0x1]
  %v927 = vlaneseq
  %v928 = vshrl.u32 %v927, 7
  %v929 = vsub.s32 0, %v928
  %v930 = vrot.slane %v926, %v929
  %v935 = vunpack.c.l.b16 %v922
  %v936 = vunpack.c.l.b16 %v923
  %v937 = vunpack.c.l.b16 %v924
  %v938 = vunpack.c.l.b16 %v925
  %v939 = vpack.c.b16 %v936, %v935
  %v940 = vpack.c.b16 %v938, %v937
  %v944 = vsel %vm110, %v921, 0
  %946 = vmatprep.subr.bf16.mxu0 0
  %947 = vmatpush1.bf16.msra.mxu0 %v939
  %948 = vmatprep.subr.bf16.mxu0 0
  %949 = vmatpush1.bf16.msra.mxu0 %v940
  %950 = vmatprep.subr.bf16.mxu0 0
  %951 = vmatpush1.bf16.msra.mxu0 0
  %952 = vmatprep.subr.bf16.mxu0 0
  %953 = vmatpush1.bf16.msra.mxu0 0
  %954 = vmatprep.subr.bf16.mxu0 0
  %955 = vmatpush1.bf16.msra.mxu0 0
  %956 = vmatprep.subr.bf16.mxu0 0
  %957 = vmatpush1.bf16.msra.mxu0 0
  %958 = vmatprep.subr.bf16.mxu0 0
  %959 = vmatpush1.bf16.msra.mxu0 0
  %960 = vmatprep.subr.bf16.mxu0 0
  %961 = vmatpush1.bf16.msra.mxu0 0
  %962 = vmatprep.subr.bf16.mxu0 0
  %963 = vmatpush1.bf16.msra.mxu0 0
  %964 = vmatprep.subr.bf16.mxu0 0
  %965 = vmatpush1.bf16.msra.mxu0 0
  %966 = vmatprep.subr.bf16.mxu0 0
  %967 = vmatpush1.bf16.msra.mxu0 0
  %968 = vmatprep.subr.bf16.mxu0 0
  %969 = vmatpush1.bf16.msra.mxu0 0
  %970 = vmatprep.subr.bf16.mxu0 0
  %971 = vmatpush1.bf16.msra.mxu0 0
  %972 = vmatprep.subr.bf16.mxu0 0
  %973 = vmatpush1.bf16.msra.mxu0 0
  %974 = vmatprep.subr.bf16.mxu0 0
  %975 = vmatpush1.bf16.msra.mxu0 0
  %976 = vmatprep.subr.bf16.mxu0 0
  %977 = vmatpush1.bf16.msra.mxu0 0
  %978 = vmatprep.mubr.bf16.mxu0 0
  %979 = vmatmul.mubr.bf16.gmra.mrb[0].mxu0 %v944
  %v980 = vpop.f32.mrb[0].mxu0
  %v981 = vadd.f32 %v930, %v980
  %v982 = vpop.f32.mrb[0].mxu0
  %v983 = vpop.f32.mrb[0].mxu0
  %v984 = vadd.f32 %v930, %v983
  %v985 = vpop.f32.mrb[0].mxu0
  %986 = vdwg.mxu0
  %v987 = vpack.c.bf16 %v984, %v981
  %v988 = vpack.c.bf16 %v882, %v881
  %v989 = vpack.c.bf16 %v884, %v883
  %v991 = vsel %vm110, %v987, 0
  %v994 = vsel %vm110, %v988, 0
  %v997 = vsel %vm110, %v989, 0
  %999 = vmatprep.subr.bf16.mxu0 0
  %1000 = vmatpush1.bf16.xpose.msra.mxu0 %v994
  %1001 = vmatprep.subr.bf16.mxu0 0
  %1002 = vmatpush1.bf16.xpose.msra.mxu0 %v997
  %1003 = vmatprep.subr.bf16.mxu0 0
  %1004 = vmatpush1.bf16.xpose.msra.mxu0 0
  %1005 = vmatprep.subr.bf16.mxu0 0
  %1006 = vmatpush1.bf16.xpose.msra.mxu0 0
  %1007 = vmatprep.subr.bf16.mxu0 0
  %1008 = vmatpush1.bf16.xpose.msra.mxu0 0
  %1009 = vmatprep.subr.bf16.mxu0 0
  %1010 = vmatpush1.bf16.xpose.msra.mxu0 0
  %1011 = vmatprep.subr.bf16.mxu0 0
  %1012 = vmatpush1.bf16.xpose.msra.mxu0 0
  %1013 = vmatprep.subr.bf16.mxu0 0
  %1014 = vmatpush1.bf16.xpose.msra.mxu0 0
  %1015 = vmatprep.subr.bf16.mxu0 0
  %1016 = vmatpush1.bf16.xpose.msra.mxu0 0
  %1017 = vmatprep.subr.bf16.mxu0 0
  %1018 = vmatpush1.bf16.xpose.msra.mxu0 0
  %1019 = vmatprep.subr.bf16.mxu0 0
  %1020 = vmatpush1.bf16.xpose.msra.mxu0 0
  %1021 = vmatprep.subr.bf16.mxu0 0
  %1022 = vmatpush1.bf16.xpose.msra.mxu0 0
  %1023 = vmatprep.subr.bf16.mxu0 0
  %1024 = vmatpush1.bf16.xpose.msra.mxu0 0
  %1025 = vmatprep.subr.bf16.mxu0 0
  %1026 = vmatpush1.bf16.xpose.msra.mxu0 0
  %1027 = vmatprep.subr.bf16.mxu0 0
  %1028 = vmatpush1.bf16.xpose.msra.mxu0 0
  %1029 = vmatprep.subr.bf16.mxu0 0
  %1030 = vmatpush1.bf16.xpose.msra.mxu0 0
  %1031 = vmatprep.mubr.bf16.mxu0 0
  %1032 = vmatmul.mubr.bf16.gmra.mrb[0].mxu0 %v991
  %v1033 = vpop.f32.mrb[0].mxu0
  %v1034 = vadd.f32 0.0, %v1033
  %v1035 = vpop.f32.mrb[0].mxu0
  %v1036 = vpop.f32.mrb[0].mxu0
  %v1037 = vadd.f32 0.0, %v1036
  %v1038 = vpop.f32.mrb[0].mxu0
  %1039 = vdwg.mxu0
  %v1040 = vmul.f32 %v1034, 0.17677669
  %v1041 = vmul.f32 %v1037, 0.17677669
  %v1042 = vld [vmem:[%s3 + $0xd0] sm:$0xff]
  %v1043 = vld [vmem:[%s3 + $0xd8] sm:$0x3f]
  %v1044 = vadd.f32 %v1040, %v1042
  %v1045 = vadd.f32 %v1041, %v1043
  %v1046 = vsel %vm110, %v1044, -inf
  %1047 = vmax.xlane.f32.xlu0 %v1046
  %v1048 = vpop.xlane.xlu0 %1047
  %v1049 = vsel %vm759, %v1045, -inf
  %1050 = vmax.xlane.f32.xlu0 %v1049
  %v1051 = vpop.xlane.xlu0 %1050
  %v1052 = vsub.f32 %v1044, %v1048
  %v1053 = vsub.f32 %v1045, %v1051
  %v1054 = vmul.f32 %v1052, 1.442695
  %v1055 = vpow.pop %v1054
  %v1056 = vmul.f32 %v1053, 1.442695
  %v1057 = vpow.pop %v1056
  %v1058 = vsel %vm110, %v1055, 0.0
  %1059 = vadd.xlane.f32.xlu0 %v1058
  %v1060 = vpop.xlane.xlu0 %1059
  %v1061 = vsel %vm759, %v1057, 0.0
  %1062 = vadd.xlane.f32.xlu0 %v1061
  %v1063 = vpop.xlane.xlu0 %1062
  %v1064 = vrcp.pop %v1060
  %v1065 = vrcp.pop %v1063
  %v1066 = vmul.f32 %v1055, %v1064
  %v1067 = vmul.f32 %v1057, %v1065
  %v1068 = vpack.c.bf16 %v1067, %v1066
  %v1069 = vpack.c.bf16 %v866, %v863
  %v1070 = vpack.c.bf16 %v874, %v871
  %1073 = vrot.lane.b32.xlu0 %v1069, 96
  %v1074 = vpop.permute.xlu0 %1073
  %1075 = vrot.lane.b32.xlu0 %v1070, 96
  %v1076 = vpop.permute.xlu0 %1075
  %v1080 = vsel %vm110, %v1068, 0
  %1082 = vmatprep.subr.bf16.mxu0 0
  %1083 = vmatpush1.bf16.msra.mxu0 %v1074
  %1084 = vmatprep.subr.bf16.mxu0 0
  %1085 = vmatpush1.bf16.msra.mxu0 %v1076
  %1086 = vmatprep.subr.bf16.mxu0 0
  %1087 = vmatpush1.bf16.msra.mxu0 0
  %1088 = vmatprep.subr.bf16.mxu0 0
  %1089 = vmatpush1.bf16.msra.mxu0 0
  %1090 = vmatprep.subr.bf16.mxu0 0
  %1091 = vmatpush1.bf16.msra.mxu0 0
  %1092 = vmatprep.subr.bf16.mxu0 0
  %1093 = vmatpush1.bf16.msra.mxu0 0
  %1094 = vmatprep.subr.bf16.mxu0 0
  %1095 = vmatpush1.bf16.msra.mxu0 0
  %1096 = vmatprep.subr.bf16.mxu0 0
  %1097 = vmatpush1.bf16.msra.mxu0 0
  %1098 = vmatprep.subr.bf16.mxu0 0
  %1099 = vmatpush1.bf16.msra.mxu0 0
  %1100 = vmatprep.subr.bf16.mxu0 0
  %1101 = vmatpush1.bf16.msra.mxu0 0
  %1102 = vmatprep.subr.bf16.mxu0 0
  %1103 = vmatpush1.bf16.msra.mxu0 0
  %1104 = vmatprep.subr.bf16.mxu0 0
  %1105 = vmatpush1.bf16.msra.mxu0 0
  %1106 = vmatprep.subr.bf16.mxu0 0
  %1107 = vmatpush1.bf16.msra.mxu0 0
  %1108 = vmatprep.subr.bf16.mxu0 0
  %1109 = vmatpush1.bf16.msra.mxu0 0
  %1110 = vmatprep.subr.bf16.mxu0 0
  %1111 = vmatpush1.bf16.msra.mxu0 0
  %1112 = vmatprep.subr.bf16.mxu0 0
  %1113 = vmatpush1.bf16.msra.mxu0 0
  %1114 = vmatprep.mubr.bf16.mxu0 0
  %1115 = vmatmul.mubr.bf16.gmra.mrb[0].mxu0 %v1080
  %v1116 = vpop.f32.mrb[0].mxu0
  %v1117 = vadd.f32 0.0, %v1116
  %v1118 = vpop.f32.mrb[0].mxu0
  %v1119 = vpop.f32.mrb[0].mxu0
  %v1120 = vadd.f32 0.0, %v1119
  %v1121 = vpop.f32.mrb[0].mxu0
  %1122 = vdwg.mxu0
  %v1123 = vpack.c.bf16 %v1120, %v1117
  %v1124 = vld [vmem:[%s2 + $0x88] sm:$0xf]
  %v1125 = vld [vmem:[%s2 + $0x8c] sm:$0xf]
  %v1126 = vld [vmem:[%s2 + $0x90] sm:$0xf]
  %v1127 = vld [vmem:[%s2 + $0x94] sm:$0xf]
  %v1128 = vld [vmem:[%s3 + $0x58] sm:$0x1]
  %v1129 = vlaneseq
  %v1130 = vshrl.u32 %v1129, 7
  %v1131 = vsub.s32 0, %v1130
  %v1132 = vrot.slane %v1128, %v1131
  %v1137 = vunpack.c.l.b16 %v1124
  %v1138 = vunpack.c.l.b16 %v1125
  %v1139 = vunpack.c.l.b16 %v1126
  %v1140 = vunpack.c.l.b16 %v1127
  %v1141 = vpack.c.b16 %v1138, %v1137
  %v1142 = vpack.c.b16 %v1140, %v1139
  %v1146 = vsel %vm110, %v1123, 0
  %1148 = vmatprep.subr.bf16.mxu0 0
  %1149 = vmatpush1.bf16.msra.mxu0 %v1141
  %1150 = vmatprep.subr.bf16.mxu0 0
  %1151 = vmatpush1.bf16.msra.mxu0 %v1142
  %1152 = vmatprep.subr.bf16.mxu0 0
  %1153 = vmatpush1.bf16.msra.mxu0 0
  %1154 = vmatprep.subr.bf16.mxu0 0
  %1155 = vmatpush1.bf16.msra.mxu0 0
  %1156 = vmatprep.subr.bf16.mxu0 0
  %1157 = vmatpush1.bf16.msra.mxu0 0
  %1158 = vmatprep.subr.bf16.mxu0 0
  %1159 = vmatpush1.bf16.msra.mxu0 0
  %1160 = vmatprep.subr.bf16.mxu0 0
  %1161 = vmatpush1.bf16.msra.mxu0 0
  %1162 = vmatprep.subr.bf16.mxu0 0
  %1163 = vmatpush1.bf16.msra.mxu0 0
  %1164 = vmatprep.subr.bf16.mxu0 0
  %1165 = vmatpush1.bf16.msra.mxu0 0
  %1166 = vmatprep.subr.bf16.mxu0 0
  %1167 = vmatpush1.bf16.msra.mxu0 0
  %1168 = vmatprep.subr.bf16.mxu0 0
  %1169 = vmatpush1.bf16.msra.mxu0 0
  %1170 = vmatprep.subr.bf16.mxu0 0
  %1171 = vmatpush1.bf16.msra.mxu0 0
  %1172 = vmatprep.subr.bf16.mxu0 0
  %1173 = vmatpush1.bf16.msra.mxu0 0
  %1174 = vmatprep.subr.bf16.mxu0 0
  %1175 = vmatpush1.bf16.msra.mxu0 0
  %1176 = vmatprep.subr.bf16.mxu0 0
  %1177 = vmatpush1.bf16.msra.mxu0 0
  %1178 = vmatprep.subr.bf16.mxu0 0
  %1179 = vmatpush1.bf16.msra.mxu0 0
  %1180 = vmatprep.mubr.bf16.mxu0 0
  %1181 = vmatmul.mubr.bf16.gmra.mrb[0].mxu0 %v1146
  %v1182 = vpop.f32.mrb[0].mxu0
  %v1183 = vadd.f32 %v1132, %v1182
  %v1184 = vpop.f32.mrb[0].mxu0
  %v1185 = vpop.f32.mrb[0].mxu0
  %v1186 = vadd.f32 %v1132, %v1185
  %v1187 = vpop.f32.mrb[0].mxu0
  %1188 = vdwg.mxu0
  %v1189 = vadd.f32 %v797, %v1183
  %v1190 = vadd.f32 %v798, %v1186
  %v1191 = vld [vmem:[%s3 + $0x60] sm:$0x3]
  %v1192 = vsel %vm110, %v1189, 0.0
  %1193 = vadd.xlane.f32.xlu0 %v1192
  %v1194 = vpop.xlane.xlu0 %1193
  %v1195 = vsel %vm759, %v1190, 0.0
  %1196 = vadd.xlane.f32.xlu0 %v1195
  %v1197 = vpop.xlane.xlu0 %1196
  %v1198 = vmul.f32 %v1194, %v123
  %v1199 = vmul.f32 %v1197, %v123
  %v1200 = vmul.f32 %v1189, %v1189
  %v1201 = vmul.f32 %v1190, %v1190
  %v1202 = vsel %vm110, %v1200, 0.0
  %1203 = vadd.xlane.f32.xlu0 %v1202
  %v1204 = vpop.xlane.xlu0 %1203
  %v1205 = vsel %vm759, %v1201, 0.0
  %1206 = vadd.xlane.f32.xlu0 %v1205
  %v1207 = vpop.xlane.xlu0 %1206
  %v1208 = vmul.f32 %v1204, %v123
  %v1209 = vmul.f32 %v1207, %v123
  %v1210 = vmul.f32 %v1198, %v1198
  %v1211 = vmul.f32 %v1199, %v1199
  %v1212 = vsub.f32 %v1208, %v1210
  %v1213 = vsub.f32 %v1209, %v1211
  %v1214 = vsub.f32 %v1189, %v1198
  %v1215 = vsub.f32 %v1190, %v1199
  %v1216 = vadd.f32 %v1212, 1e-05
  %v1217 = vadd.f32 %v1213, 1e-05
  %v1218 = vrsqrt.pop %v1216
  %v1219 = vrsqrt.pop %v1217
  %v1220 = vmul.f32 %v1214, %v1218
  %v1221 = vmul.f32 %v1215, %v1219
  %v1222 = vlaneseq
  %v1223 = vshrl.u32 %v1222, 7
  %v1224 = vsub.s32 0, %v1223
  %v1225 = vrot.slane %v1191, %v1224
  %v1226 = vmul.f32 %v1220, %v1225
  %v1227 = vmul.f32 %v1221, %v1225
  %v1228 = vlaneseq
  %v1229 = vshrl.u32 %v1228, 7
  %v1230 = vsub.s32 1, %v1229
  %v1231 = vrot.slane %v1191, %v1230
  %v1232 = vadd.f32 %v1226, %v1231
  %v1233 = vadd.f32 %v1227, %v1231
  %v1234 = vpack.c.bf16 %v1233, %v1232
  %v1235 = vld [vmem:[%s2 + $0x98] sm:$0xf]
  %v1236 = vld [vmem:[%s2 + $0x9c] sm:$0xf]
  %v1237 = vld [vmem:[%s2 + $0xa0] sm:$0xf]
  %v1238 = vld [vmem:[%s2 + $0xa4] sm:$0xf]
  %v1239 = vld [vmem:[%s3 + $0x68] sm:$0x1]
  %v1240 = vlaneseq
  %v1241 = vshrl.u32 %v1240, 7
  %v1242 = vsub.s32 0, %v1241
  %v1243 = vrot.slane %v1239, %v1242
  %v1248 = vunpack.c.l.b16 %v1235
  %v1249 = vunpack.c.l.b16 %v1236
  %v1250 = vunpack.c.l.b16 %v1237
  %v1251 = vunpack.c.l.b16 %v1238
  %v1252 = vpack.c.b16 %v1249, %v1248
  %v1253 = vpack.c.b16 %v1251, %v1250
  %v1257 = vsel %vm110, %v1234, 0
  %1259 = vmatprep.subr.bf16.mxu0 0
  %1260 = vmatpush1.bf16.msra.mxu0 %v1252
  %1261 = vmatprep.subr.bf16.mxu0 0
  %1262 = vmatpush1.bf16.msra.mxu0 %v1253
  %1263 = vmatprep.subr.bf16.mxu0 0
  %1264 = vmatpush1.bf16.msra.mxu0 0
  %1265 = vmatprep.subr.bf16.mxu0 0
  %1266 = vmatpush1.bf16.msra.mxu0 0
  %1267 = vmatprep.subr.bf16.mxu0 0
  %1268 = vmatpush1.bf16.msra.mxu0 0
  %1269 = vmatprep.subr.bf16.mxu0 0
  %1270 = vmatpush1.bf16.msra.mxu0 0
  %1271 = vmatprep.subr.bf16.mxu0 0
  %1272 = vmatpush1.bf16.msra.mxu0 0
  %1273 = vmatprep.subr.bf16.mxu0 0
  %1274 = vmatpush1.bf16.msra.mxu0 0
  %1275 = vmatprep.subr.bf16.mxu0 0
  %1276 = vmatpush1.bf16.msra.mxu0 0
  %1277 = vmatprep.subr.bf16.mxu0 0
  %1278 = vmatpush1.bf16.msra.mxu0 0
  %1279 = vmatprep.subr.bf16.mxu0 0
  %1280 = vmatpush1.bf16.msra.mxu0 0
  %1281 = vmatprep.subr.bf16.mxu0 0
  %1282 = vmatpush1.bf16.msra.mxu0 0
  %1283 = vmatprep.subr.bf16.mxu0 0
  %1284 = vmatpush1.bf16.msra.mxu0 0
  %1285 = vmatprep.subr.bf16.mxu0 0
  %1286 = vmatpush1.bf16.msra.mxu0 0
  %1287 = vmatprep.subr.bf16.mxu0 0
  %1288 = vmatpush1.bf16.msra.mxu0 0
  %1289 = vmatprep.subr.bf16.mxu0 0
  %1290 = vmatpush1.bf16.msra.mxu0 0
  %1291 = vmatprep.mubr.bf16.mxu0 0
  %1292 = vmatmul.mubr.bf16.gmra.mrb[0].mxu0 %v1257
  %v1293 = vpop.f32.mrb[0].mxu0
  %v1294 = vadd.f32 %v1243, %v1293
  %v1295 = vpop.f32.mrb[0].mxu0
  %v1296 = vpop.f32.mrb[0].mxu0
  %v1297 = vadd.f32 %v1243, %v1296
  %v1298 = vpop.f32.mrb[0].mxu0
  %1299 = vdwg.mxu0
  %v1300 = vmax.f32 %v1294, 0.0
  %v1301 = vmax.f32 %v1297, 0.0
  %v1302 = vpack.c.bf16 %v1301, %v1300
  %v1303 = vld [vmem:[%s2 + $0xa8] sm:$0xf]
  %v1304 = vld [vmem:[%s2 + $0xac] sm:$0xf]
  %v1305 = vld [vmem:[%s2 + $0xb0] sm:$0xf]
  %v1306 = vld [vmem:[%s2 + $0xb4] sm:$0xf]
  %v1307 = vld [vmem:[%s2 + $0xb8] sm:$0xf]
  %v1308 = vld [vmem:[%s2 + $0xbc] sm:$0xf]
  %v1309 = vld [vmem:[%s2 + $0xc0] sm:$0xf]
  %v1310 = vld [vmem:[%s2 + $0xc4] sm:$0xf]
  %v1311 = vld [vmem:[%s3 + $0x70] sm:$0x1]
  %v1312 = vlaneseq
  %v1313 = vshrl.u32 %v1312, 7
  %v1314 = vsub.s32 0, %v1313
  %v1315 = vrot.slane %v1311, %v1314
  %v1324 = vunpack.c.l.b16 %v1303
  %v1325 = vunpack.c.l.b16 %v1304
  %v1326 = vunpack.c.l.b16 %v1305
  %v1327 = vunpack.c.l.b16 %v1306
  %v1328 = vunpack.c.l.b16 %v1307
  %v1329 = vunpack.c.l.b16 %v1308
  %v1330 = vunpack.c.l.b16 %v1309
  %v1331 = vunpack.c.l.b16 %v1310
  %v1332 = vpack.c.b16 %v1325, %v1324
  %v1333 = vpack.c.b16 %v1327, %v1326
  %v1334 = vpack.c.b16 %v1329, %v1328
  %v1335 = vpack.c.b16 %v1331, %v1330
  %v1341 = vsel %vm341, %v1302, 0
  %1343 = vmatprep.subr.bf16.mxu0 0
  %1344 = vmatpush1.bf16.msra.mxu0 %v1332
  %1345 = vmatprep.subr.bf16.mxu0 0
  %1346 = vmatpush1.bf16.msra.mxu0 %v1333
  %1347 = vmatprep.subr.bf16.mxu0 0
  %1348 = vmatpush1.bf16.msra.mxu0 %v1334
  %1349 = vmatprep.subr.bf16.mxu0 0
  %1350 = vmatpush1.bf16.msra.mxu0 %v1335
  %1351 = vmatprep.subr.bf16.mxu0 0
  %1352 = vmatpush1.bf16.msra.mxu0 0
  %1353 = vmatprep.subr.bf16.mxu0 0
  %1354 = vmatpush1.bf16.msra.mxu0 0
  %1355 = vmatprep.subr.bf16.mxu0 0
  %1356 = vmatpush1.bf16.msra.mxu0 0
  %1357 = vmatprep.subr.bf16.mxu0 0
  %1358 = vmatpush1.bf16.msra.mxu0 0
  %1359 = vmatprep.subr.bf16.mxu0 0
  %1360 = vmatpush1.bf16.msra.mxu0 0
  %1361 = vmatprep.subr.bf16.mxu0 0
  %1362 = vmatpush1.bf16.msra.mxu0 0
  %1363 = vmatprep.subr.bf16.mxu0 0
  %1364 = vmatpush1.bf16.msra.mxu0 0
  %1365 = vmatprep.subr.bf16.mxu0 0
  %1366 = vmatpush1.bf16.msra.mxu0 0
  %1367 = vmatprep.subr.bf16.mxu0 0
  %1368 = vmatpush1.bf16.msra.mxu0 0
  %1369 = vmatprep.subr.bf16.mxu0 0
  %1370 = vmatpush1.bf16.msra.mxu0 0
  %1371 = vmatprep.subr.bf16.mxu0 0
  %1372 = vmatpush1.bf16.msra.mxu0 0
  %1373 = vmatprep.subr.bf16.mxu0 0
  %1374 = vmatpush1.bf16.msra.mxu0 0
  %1375 = vmatprep.mubr.bf16.mxu0 0
  %1376 = vmatmul.mubr.bf16.gmra.mrb[0].mxu0 %v1341
  %v1377 = vpop.f32.mrb[0].mxu0
  %v1378 = vadd.f32 %v1315, %v1377
  %v1379 = vpop.f32.mrb[0].mxu0
  %v1380 = vpop.f32.mrb[0].mxu0
  %v1381 = vadd.f32 %v1315, %v1380
  %v1382 = vpop.f32.mrb[0].mxu0
  %1383 = vdwg.mxu0
  %v1384 = vadd.f32 %v1232, %v1378
  %v1385 = vadd.f32 %v1233, %v1381
  %v1386 = vld [vmem:[%s3 + $0x78] sm:$0x3]
  %v1387 = vsel %vm110, %v1384, 0.0
  %1388 = vadd.xlane.f32.xlu0 %v1387
  %v1389 = vpop.xlane.xlu0 %1388
  %v1390 = vsel %vm759, %v1385, 0.0
  %1391 = vadd.xlane.f32.xlu0 %v1390
  %v1392 = vpop.xlane.xlu0 %1391
  %v1393 = vmul.f32 %v1389, %v123
  %v1394 = vmul.f32 %v1392, %v123
  %v1395 = vmul.f32 %v1384, %v1384
  %v1396 = vmul.f32 %v1385, %v1385
  %v1397 = vsel %vm110, %v1395, 0.0
  %1398 = vadd.xlane.f32.xlu0 %v1397
  %v1399 = vpop.xlane.xlu0 %1398
  %v1400 = vsel %vm759, %v1396, 0.0
  %1401 = vadd.xlane.f32.xlu0 %v1400
  %v1402 = vpop.xlane.xlu0 %1401
  %v1403 = vmul.f32 %v1399, %v123
  %v1404 = vmul.f32 %v1402, %v123
  %v1405 = vmul.f32 %v1393, %v1393
  %v1406 = vmul.f32 %v1394, %v1394
  %v1407 = vsub.f32 %v1403, %v1405
  %v1408 = vsub.f32 %v1404, %v1406
  %v1409 = vsub.f32 %v1384, %v1393
  %v1410 = vsub.f32 %v1385, %v1394
  %v1411 = vadd.f32 %v1407, 1e-05
  %v1412 = vadd.f32 %v1408, 1e-05
  %v1413 = vrsqrt.pop %v1411
  %v1414 = vrsqrt.pop %v1412
  %v1415 = vmul.f32 %v1409, %v1413
  %v1416 = vmul.f32 %v1410, %v1414
  %v1417 = vlaneseq
  %v1418 = vshrl.u32 %v1417, 7
  %v1419 = vsub.s32 0, %v1418
  %v1420 = vrot.slane %v1386, %v1419
  %v1421 = vmul.f32 %v1415, %v1420
  %v1422 = vmul.f32 %v1416, %v1420
  %v1423 = vlaneseq
  %v1424 = vshrl.u32 %v1423, 7
  %v1425 = vsub.s32 1, %v1424
  %v1426 = vrot.slane %v1386, %v1425
  %v1427 = vadd.f32 %v1421, %v1426
  %v1428 = vadd.f32 %v1422, %v1426
  %v1429 = vpack.c.bf16 %v1428, %v1427
  %v1430 = vld [vmem:[%s2 + $0xc8] sm:$0xf]
  %v1431 = vld [vmem:[%s2 + $0xcc] sm:$0xf]
  %v1432 = vld [vmem:[%s2 + $0xd0] sm:$0xf]
  %v1433 = vld [vmem:[%s2 + $0xd4] sm:$0xf]
  %v1434 = vld [vmem:[%s3 + $0x80] sm:$0x1]
  %v1435 = vlaneseq
  %v1436 = vshrl.u32 %v1435, 7
  %v1437 = vsub.s32 0, %v1436
  %v1438 = vrot.slane %v1434, %v1437
  %v1443 = vunpack.c.l.b16 %v1430
  %v1444 = vunpack.c.l.b16 %v1431
  %v1445 = vunpack.c.l.b16 %v1432
  %v1446 = vunpack.c.l.b16 %v1433
  %v1447 = vpack.c.b16 %v1444, %v1443
  %v1448 = vpack.c.b16 %v1446, %v1445
  %v1452 = vsel %vm110, %v1429, 0
  %1454 = vmatprep.subr.bf16.mxu0 0
  %1455 = vmatpush1.bf16.msra.mxu0 %v1447
  %1456 = vmatprep.subr.bf16.mxu0 0
  %1457 = vmatpush1.bf16.msra.mxu0 %v1448
  %1458 = vmatprep.subr.bf16.mxu0 0
  %1459 = vmatpush1.bf16.msra.mxu0 0
  %1460 = vmatprep.subr.bf16.mxu0 0
  %1461 = vmatpush1.bf16.msra.mxu0 0
  %1462 = vmatprep.subr.bf16.mxu0 0
  %1463 = vmatpush1.bf16.msra.mxu0 0
  %1464 = vmatprep.subr.bf16.mxu0 0
  %1465 = vmatpush1.bf16.msra.mxu0 0
  %1466 = vmatprep.subr.bf16.mxu0 0
  %1467 = vmatpush1.bf16.msra.mxu0 0
  %1468 = vmatprep.subr.bf16.mxu0 0
  %1469 = vmatpush1.bf16.msra.mxu0 0
  %1470 = vmatprep.subr.bf16.mxu0 0
  %1471 = vmatpush1.bf16.msra.mxu0 0
  %1472 = vmatprep.subr.bf16.mxu0 0
  %1473 = vmatpush1.bf16.msra.mxu0 0
  %1474 = vmatprep.subr.bf16.mxu0 0
  %1475 = vmatpush1.bf16.msra.mxu0 0
  %1476 = vmatprep.subr.bf16.mxu0 0
  %1477 = vmatpush1.bf16.msra.mxu0 0
  %1478 = vmatprep.subr.bf16.mxu0 0
  %1479 = vmatpush1.bf16.msra.mxu0 0
  %1480 = vmatprep.subr.bf16.mxu0 0
  %1481 = vmatpush1.bf16.msra.mxu0 0
  %1482 = vmatprep.subr.bf16.mxu0 0
  %1483 = vmatpush1.bf16.msra.mxu0 0
  %1484 = vmatprep.subr.bf16.mxu0 0
  %1485 = vmatpush1.bf16.msra.mxu0 0
  %1486 = vmatprep.mubr.bf16.mxu0 0
  %1487 = vmatmul.mubr.bf16.gmra.mrb[0].mxu0 %v1452
  %v1488 = vpop.f32.mrb[0].mxu0
  %v1489 = vadd.f32 %v1438, %v1488
  %v1490 = vpop.f32.mrb[0].mxu0
  %v1491 = vpop.f32.mrb[0].mxu0
  %v1492 = vadd.f32 %v1438, %v1491
  %v1493 = vpop.f32.mrb[0].mxu0
  %1494 = vdwg.mxu0
  %v1495 = vmax.f32 %v1489, 0.0
  %v1496 = vmax.f32 %v1492, 0.0
  %v1497 = vpack.c.bf16 %v1496, %v1495
  %v1498 = vld [vmem:[%s2 + $0xd8] sm:$0xf]
  %v1499 = vld [vmem:[%s2 + $0xdc] sm:$0xf]
  %v1500 = vld [vmem:[%s2 + $0xe0] sm:$0xf]
  %v1501 = vld [vmem:[%s2 + $0xe4] sm:$0xf]
  %v1502 = vld [vmem:[%s3 + $0x88] sm:$0x1]
  %v1503 = vlaneseq
  %v1504 = vshrl.u32 %v1503, 7
  %v1505 = vsub.s32 0, %v1504
  %v1506 = vrot.slane %v1502, %v1505
  %v1511 = vunpack.c.l.b16 %v1498
  %v1512 = vunpack.c.l.b16 %v1499
  %v1513 = vunpack.c.l.b16 %v1500
  %v1514 = vunpack.c.l.b16 %v1501
  %v1515 = vpack.c.b16 %v1512, %v1511
  %v1516 = vpack.c.b16 %v1514, %v1513
  %v1520 = vsel %vm110, %v1497, 0
  %1522 = vmatprep.subr.bf16.mxu0 0
  %1523 = vmatpush1.bf16.msra.mxu0 %v1515
  %1524 = vmatprep.subr.bf16.mxu0 0
  %1525 = vmatpush1.bf16.msra.mxu0 %v1516
  %1526 = vmatprep.subr.bf16.mxu0 0
  %1527 = vmatpush1.bf16.msra.mxu0 0
  %1528 = vmatprep.subr.bf16.mxu0 0
  %1529 = vmatpush1.bf16.msra.mxu0 0
  %1530 = vmatprep.subr.bf16.mxu0 0
  %1531 = vmatpush1.bf16.msra.mxu0 0
  %1532 = vmatprep.subr.bf16.mxu0 0
  %1533 = vmatpush1.bf16.msra.mxu0 0
  %1534 = vmatprep.subr.bf16.mxu0 0
  %1535 = vmatpush1.bf16.msra.mxu0 0
  %1536 = vmatprep.subr.bf16.mxu0 0
  %1537 = vmatpush1.bf16.msra.mxu0 0
  %1538 = vmatprep.subr.bf16.mxu0 0
  %1539 = vmatpush1.bf16.msra.mxu0 0
  %1540 = vmatprep.subr.bf16.mxu0 0
  %1541 = vmatpush1.bf16.msra.mxu0 0
  %1542 = vmatprep.subr.bf16.mxu0 0
  %1543 = vmatpush1.bf16.msra.mxu0 0
  %1544 = vmatprep.subr.bf16.mxu0 0
  %1545 = vmatpush1.bf16.msra.mxu0 0
  %1546 = vmatprep.subr.bf16.mxu0 0
  %1547 = vmatpush1.bf16.msra.mxu0 0
  %1548 = vmatprep.subr.bf16.mxu0 0
  %1549 = vmatpush1.bf16.msra.mxu0 0
  %1550 = vmatprep.subr.bf16.mxu0 0
  %1551 = vmatpush1.bf16.msra.mxu0 0
  %1552 = vmatprep.subr.bf16.mxu0 0
  %1553 = vmatpush1.bf16.msra.mxu0 0
  %1554 = vmatprep.mubr.bf16.mxu0 0
  %1555 = vmatmul.mubr.bf16.gmra.mrb[0].mxu0 %v1520
  %v1556 = vpop.f32.mrb[0].mxu0
  %v1557 = vadd.f32 %v1506, %v1556
  %v1558 = vpop.f32.mrb[0].mxu0
  %v1559 = vpop.f32.mrb[0].mxu0
  %v1560 = vadd.f32 %v1506, %v1559
  %v1561 = vpop.f32.mrb[0].mxu0
  %1562 = vdwg.mxu0
  %v1563 = vmax.f32 %v1557, 0.0
  %v1564 = vmax.f32 %v1560, 0.0
  %v1565 = vpack.c.bf16 %v1564, %v1563
  %v1566 = vld [vmem:[%s2 + $0xe8] sm:$0xf]
  %v1567 = vld [vmem:[%s2 + $0xec] sm:$0xf]
  %v1568 = vld [vmem:[%s2 + $0xf0] sm:$0xf]
  %v1569 = vld [vmem:[%s2 + $0xf4] sm:$0xf]
  %v1570 = vld [vmem:[%s3 + $0x90] sm:$0x1]
  %v1571 = vlaneseq
  %v1572 = vshrl.u32 %v1571, 7
  %v1573 = vsub.s32 0, %v1572
  %v1574 = vrot.slane %v1570, %v1573
  %v1579 = vunpack.c.l.b16 %v1566
  %v1580 = vunpack.c.l.b16 %v1567
  %v1581 = vunpack.c.l.b16 %v1568
  %v1582 = vunpack.c.l.b16 %v1569
  %v1583 = vpack.c.b16 %v1580, %v1579
  %v1584 = vpack.c.b16 %v1582, %v1581
  %v1588 = vsel %vm110, %v1565, 0
  %1590 = vmatprep.subr.bf16.mxu0 0
  %1591 = vmatpush1.bf16.msra.mxu0 %v1583
  %1592 = vmatprep.subr.bf16.mxu0 0
  %1593 = vmatpush1.bf16.msra.mxu0 %v1584
  %1594 = vmatprep.subr.bf16.mxu0 0
  %1595 = vmatpush1.bf16.msra.mxu0 0
  %1596 = vmatprep.subr.bf16.mxu0 0
  %1597 = vmatpush1.bf16.msra.mxu0 0
  %1598 = vmatprep.subr.bf16.mxu0 0
  %1599 = vmatpush1.bf16.msra.mxu0 0
  %1600 = vmatprep.subr.bf16.mxu0 0
  %1601 = vmatpush1.bf16.msra.mxu0 0
  %1602 = vmatprep.subr.bf16.mxu0 0
  %1603 = vmatpush1.bf16.msra.mxu0 0
  %1604 = vmatprep.subr.bf16.mxu0 0
  %1605 = vmatpush1.bf16.msra.mxu0 0
  %1606 = vmatprep.subr.bf16.mxu0 0
  %1607 = vmatpush1.bf16.msra.mxu0 0
  %1608 = vmatprep.subr.bf16.mxu0 0
  %1609 = vmatpush1.bf16.msra.mxu0 0
  %1610 = vmatprep.subr.bf16.mxu0 0
  %1611 = vmatpush1.bf16.msra.mxu0 0
  %1612 = vmatprep.subr.bf16.mxu0 0
  %1613 = vmatpush1.bf16.msra.mxu0 0
  %1614 = vmatprep.subr.bf16.mxu0 0
  %1615 = vmatpush1.bf16.msra.mxu0 0
  %1616 = vmatprep.subr.bf16.mxu0 0
  %1617 = vmatpush1.bf16.msra.mxu0 0
  %1618 = vmatprep.subr.bf16.mxu0 0
  %1619 = vmatpush1.bf16.msra.mxu0 0
  %1620 = vmatprep.subr.bf16.mxu0 0
  %1621 = vmatpush1.bf16.msra.mxu0 0
  %1622 = vmatprep.mubr.bf16.mxu0 0
  %1623 = vmatmul.mubr.bf16.gmra.mrb[0].mxu0 %v1588
  %v1624 = vpop.f32.mrb[0].mxu0
  %v1625 = vadd.f32 %v1574, %v1624
  %v1626 = vpop.f32.mrb[0].mxu0
  %v1627 = vpop.f32.mrb[0].mxu0
  %v1628 = vadd.f32 %v1574, %v1627
  %v1629 = vpop.f32.mrb[0].mxu0
  %1630 = vdwg.mxu0
  %v1631 = vpack.c.bf16 %v918, %v917
  %v1632 = vpack.c.bf16 %v920, %v919
  %v1633 = vld [vmem:[%s2 + $0xf8] sm:$0xf]
  %v1634 = vld [vmem:[%s2 + $0xfc] sm:$0xf]
  %v1635 = vld [vmem:[%s2 + $0x100] sm:$0xf]
  %v1636 = vld [vmem:[%s2 + $0x104] sm:$0xf]
  %v1637 = vld [vmem:[%s2 + $0x108] sm:$0xf]
  %v1638 = vld [vmem:[%s2 + $0x10c] sm:$0xf]
  %v1639 = vld [vmem:[%s2 + $0x110] sm:$0xf]
  %v1640 = vld [vmem:[%s2 + $0x114] sm:$0xf]
  %v1641 = vld [vmem:[%s3 + $0x98] sm:$0x1]
  %v1642 = vlaneseq
  %v1643 = vshrl.u32 %v1642, 7
  %v1644 = vsub.s32 0, %v1643
  %v1645 = vrot.slane %v1641, %v1644
  %1648 = vrot.lane.b32.xlu0 %v1631, 64
  %v1649 = vpop.permute.xlu0 %1648
  %1650 = vrot.lane.b32.xlu0 %v1632, 64
  %v1651 = vpop.permute.xlu0 %1650
  %v1660 = vunpack.c.l.b16 %v1633
  %v1661 = vunpack.c.l.b16 %v1634
  %v1662 = vunpack.c.l.b16 %v1635
  %v1663 = vunpack.c.l.b16 %v1636
  %v1664 = vunpack.c.l.b16 %v1637
  %v1665 = vunpack.c.l.b16 %v1638
  %v1666 = vunpack.c.l.b16 %v1639
  %v1667 = vunpack.c.l.b16 %v1640
  %v1668 = vpack.c.b16 %v1661, %v1660
  %v1669 = vpack.c.b16 %v1663, %v1662
  %v1670 = vpack.c.b16 %v1665, %v1664
  %v1671 = vpack.c.b16 %v1667, %v1666
  %v1677 = vsel %vm341, %v1649, 0
  %v1680 = vsel %vm341, %v1651, 0
  %1682 = vmatprep.subr.bf16.mxu0 0
  %1683 = vmatpush1.bf16.msra.mxu0 %v1668
  %1684 = vmatprep.subr.bf16.mxu0 0
  %1685 = vmatpush1.bf16.msra.mxu0 %v1669
  %1686 = vmatprep.subr.bf16.mxu0 0
  %1687 = vmatpush1.bf16.msra.mxu0 %v1670
  %1688 = vmatprep.subr.bf16.mxu0 0
  %1689 = vmatpush1.bf16.msra.mxu0 %v1671
  %1690 = vmatprep.subr.bf16.mxu0 0
  %1691 = vmatpush1.bf16.msra.mxu0 0
  %1692 = vmatprep.subr.bf16.mxu0 0
  %1693 = vmatpush1.bf16.msra.mxu0 0
  %1694 = vmatprep.subr.bf16.mxu0 0
  %1695 = vmatpush1.bf16.msra.mxu0 0
  %1696 = vmatprep.subr.bf16.mxu0 0
  %1697 = vmatpush1.bf16.msra.mxu0 0
  %1698 = vmatprep.subr.bf16.mxu0 0
  %1699 = vmatpush1.bf16.msra.mxu0 0
  %1700 = vmatprep.subr.bf16.mxu0 0
  %1701 = vmatpush1.bf16.msra.mxu0 0
  %1702 = vmatprep.subr.bf16.mxu0 0
  %1703 = vmatpush1.bf16.msra.mxu0 0
  %1704 = vmatprep.subr.bf16.mxu0 0
  %1705 = vmatpush1.bf16.msra.mxu0 0
  %1706 = vmatprep.subr.bf16.mxu0 0
  %1707 = vmatpush1.bf16.msra.mxu0 0
  %1708 = vmatprep.subr.bf16.mxu0 0
  %1709 = vmatpush1.bf16.msra.mxu0 0
  %1710 = vmatprep.subr.bf16.mxu0 0
  %1711 = vmatpush1.bf16.msra.mxu0 0
  %1712 = vmatprep.subr.bf16.mxu0 0
  %1713 = vmatpush1.bf16.msra.mxu0 0
  %1714 = vmatprep.mubr.bf16.mxu0 0
  %1715 = vmatmul.mubr.bf16.gmra.mrb[0].mxu0 %v1677
  %v1716 = vpop.f32.mrb[0].mxu0
  %v1717 = vadd.f32 %v1645, %v1716
  %v1718 = vpop.f32.mrb[0].mxu0
  %v1719 = vpop.f32.mrb[0].mxu0
  %v1720 = vadd.f32 %v1645, %v1719
  %v1721 = vpop.f32.mrb[0].mxu0
  %1722 = vmatprep.mubr.bf16.mxu0 0
  %1723 = vmatmul.mubr.bf16.gmra.mrb[0].mxu0 %v1680
  %v1724 = vpop.f32.mrb[0].mxu0
  %v1725 = vadd.f32 %v1645, %v1724
  %v1726 = vpop.f32.mrb[0].mxu0
  %v1727 = vpop.f32.mrb[0].mxu0
  %v1728 = vadd.f32 %v1645, %v1727
  %v1729 = vpop.f32.mrb[0].mxu0
  %1730 = vdwg.mxu0
  %v1731 = vmul.f32 %v1717, %v1717
  %v1732 = vmul.f32 %v1720, %v1720
  %v1733 = vmul.f32 %v1725, %v1725
  %v1734 = vmul.f32 %v1728, %v1728
  %v1735 = vmul.f32 %v1717, %v1731
  %v1736 = vmul.f32 %v1720, %v1732
  %v1737 = vmul.f32 %v1725, %v1733
  %v1738 = vmul.f32 %v1728, %v1734
  %v1739 = vmul.f32 %v1735, 0.044715
  %v1740 = vmul.f32 %v1736, 0.044715
  %v1741 = vmul.f32 %v1737, 0.044715
  %v1742 = vmul.f32 %v1738, 0.044715
  %v1743 = vadd.f32 %v1717, %v1739
  %v1744 = vadd.f32 %v1720, %v1740
  %v1745 = vadd.f32 %v1725, %v1741
  %v1746 = vadd.f32 %v1728, %v1742
  %v1747 = vmul.f32 %v1743, 0.7978846
  %v1748 = vmul.f32 %v1744, 0.7978846
  %v1749 = vmul.f32 %v1745, 0.7978846
  %v1750 = vmul.f32 %v1746, 0.7978846
  %v1751 = vtanh.pop %v1747
  %v1752 = vtanh.pop %v1748
  %v1753 = vtanh.pop %v1749
  %v1754 = vtanh.pop %v1750
  %v1755 = vadd.f32 %v1751, 1.0
  %v1756 = vadd.f32 %v1752, 1.0
  %v1757 = vadd.f32 %v1753, 1.0
  %v1758 = vadd.f32 %v1754, 1.0
  %v1759 = vmul.f32 %v1755, 0.5
  %v1760 = vmul.f32 %v1756, 0.5
  %v1761 = vmul.f32 %v1757, 0.5
  %v1762 = vmul.f32 %v1758, 0.5
  %v1763 = vmul.f32 %v1717, %v1759
  %v1764 = vmul.f32 %v1720, %v1760
  %v1765 = vmul.f32 %v1725, %v1761
  %v1766 = vmul.f32 %v1728, %v1762
  %v1767 = vlaneseq
  %v1768 = vshrl.u32 %v1767, 7
  %v1769 = vsub.s32 1, %v1768
  %v1770 = vrot.slane %v1625, %v1769
  %v1771 = vlaneseq
  %v1772 = vshrl.u32 %v1771, 7
  %v1773 = vsub.s32 0, %v1772
  %v1774 = vrot.slane %v1628, %v1773
  %v1775 = vmul.f32 %v1763, %v1770
  %v1776 = vmul.f32 %v1764, %v1770
  %v1777 = vmul.f32 %v1765, %v1774
  %v1778 = vmul.f32 %v1766, %v1774
  %1779 = vst [vmem:[%s4] sm:$0xff] %v1775
  %1780 = vst [vmem:[%s4 + $0x8] sm:$0xff] %v1776
  %1781 = vst [vmem:[%s4 + $0x10] sm:$0xff] %v1777
  %1782 = vst [vmem:[%s4 + $0x18] sm:$0xff] %v1778
  // Predicated region
  $region18: #{medsam_lite_forward.1} parent=0 // pred_check
    _
  $region19: #{medsam_lite_forward.1} parent=0 // pred_check_branch
    %1784 = sbr.rel (0) target = $region21
  $region20: #{medsam_lite_forward.1} parent=0 // pred_region
    _
  $region21: #{medsam_lite_forward.1} parent=0 // pred_fallthru
    _
  // Predicated region
  $region22: #{medsam_lite_forward.1} parent=0 // pred_check
    _
  $region23: #{medsam_lite_forward.1} parent=0 // pred_check_branch
    %1786 = sbr.rel (0) target = $region25
  $region24: #{medsam_lite_forward.1} parent=0 // pred_region
    _
  $region25: #{medsam_lite_forward.1} parent=0 // pred_fallthru
    _

</llo_original>
